<compile_context>
chip_gen: v6e
topology: v6e:2x2x1
jax: 0.10.0
libtpu: 0.0.40
codegen_flags: <defaults>
</compile_context>

<pallas_src>
import functools
import math

import jax
import jax.numpy as jnp
from jax.experimental import pallas as pl
from jax.experimental.pallas import tpu as pltpu


def _layer_norm(x, gamma, beta, eps=1e-5):
    mu = jnp.mean(x, axis=-1, keepdims=True)
    var = jnp.mean((x - mu) ** 2, axis=-1, keepdims=True)
    return (x - mu) * jax.lax.rsqrt(var + eps) * gamma + beta


def decoder_kernel(x_ref,
                   wq_ref, wk_ref, wv_ref,
                   bq_ref, bk_ref, bv_ref,
                   wo_ref, bo_ref,
                   w1_ref, b1_ref, w2_ref, b2_ref,
                   g1_ref, beta1_ref, g2_ref, beta2_ref,
                   o_ref,
                   q_hm, k_hm, v_hm, attn_sc,
                   *, nhead, head_dim):
    x_f32 = x_ref[...].astype(jnp.float32)        # (S, D) residual path, f32
    x_bf16 = x_f32.astype(jnp.bfloat16)           # MXU operand

    # --- QKV projections: full-width (S,D)@(D,D) bf16 matmuls, f32 accumulation.
    #     The 1/sqrt(head_dim) scale is already folded into wq/bq on the host.
    q = jnp.dot(x_bf16, wq_ref[...], preferred_element_type=jnp.float32) + bq_ref[...]
    k = jnp.dot(x_bf16, wk_ref[...], preferred_element_type=jnp.float32) + bk_ref[...]
    v = jnp.dot(x_bf16, wv_ref[...], preferred_element_type=jnp.float32) + bv_ref[...]

    # --- Repack to head-major (H, S, hd) bf16 scratch (one-shot copies; no concatenate
    #     and no per-head score tensors kept live).
    for h in range(nhead):
        lo = h * head_dim
        q_hm[h] = q[:, lo:lo + head_dim].astype(jnp.bfloat16)
        k_hm[h] = k[:, lo:lo + head_dim].astype(jnp.bfloat16)
        v_hm[h] = v[:, lo:lo + head_dim].astype(jnp.bfloat16)

    # --- Batched-head attention (softmax over keys, f32 math).
    s = jnp.einsum("hqd,hkd->hqk", q_hm[...], k_hm[...],
                   preferred_element_type=jnp.float32)          # (H, S, S)
    m = jnp.max(s, axis=-1, keepdims=True)
    p = jnp.exp(s - m)
    l = jnp.sum(p, axis=-1, keepdims=True)                       # (H, S, 1)
    ctx = jnp.einsum("hqk,hkd->hqd", p.astype(jnp.bfloat16), v_hm[...],
                     preferred_element_type=jnp.float32)         # (H, S, hd)
    # Normalize after the PV matmul: O(S*D) work instead of O(H*S^2); reciprocal on EUP.
    ctx = ctx * pl.reciprocal(l, approx=True)

    # --- Heads back into an (S, D) VMEM scratch, then full-width output projection.
    for h in range(nhead):
        lo = h * head_dim
        attn_sc[:, lo:lo + head_dim] = ctx[h].astype(jnp.bfloat16)
    attn = jnp.dot(attn_sc[...], wo_ref[...],
                   preferred_element_type=jnp.float32) + bo_ref[...]

    # --- residual + LayerNorm 1 (f32 elementwise)
    x1 = _layer_norm(x_f32 + attn, g1_ref[...], beta1_ref[...])

    # --- FFN (bf16 MXU operands, f32 accumulation / ReLU)
    h1 = jnp.dot(x1.astype(jnp.bfloat16), w1_ref[...],
                 preferred_element_type=jnp.float32) + b1_ref[...]
    h1 = jnp.maximum(h1, 0.0)
    ffn = jnp.dot(h1.astype(jnp.bfloat16), w2_ref[...],
                  preferred_element_type=jnp.float32) + b2_ref[...]

    # --- residual + LayerNorm 2
    x2 = _layer_norm(x1 + ffn, g2_ref[...], beta2_ref[...])
    o_ref[...] = x2.astype(o_ref.dtype)


def checkpointed_decoder(x, params, *, nhead):
    # TODO(synk): torch.utils.checkpoint recompute-in-backward has no forward-pass
    # equivalent; a custom_vjp re-invoking this kernel would be needed for training parity.
    B, S, D = x.shape
    head_dim = D // nhead
    dff = params["w1"].shape[1]
    scale = 1.0 / math.sqrt(head_dim)

    # Fold the attention scale into the Q projection (torch scales q *after* the bias
    # add, so both weight and bias are scaled) and cast matmul weights to bf16.
    wq = (params["wq"] * scale).astype(jnp.bfloat16)
    bq = (params["bq"] * scale).astype(jnp.float32)
    wk = params["wk"].astype(jnp.bfloat16)
    wv = params["wv"].astype(jnp.bfloat16)
    wo = params["wo"].astype(jnp.bfloat16)
    w1 = params["w1"].astype(jnp.bfloat16)
    w2 = params["w2"].astype(jnp.bfloat16)

    full = lambda shape: pl.BlockSpec(shape, lambda b: (0,) * len(shape))
    in_specs = [
        pl.BlockSpec((None, S, D), lambda b: (b, 0, 0)),      # x
        full((D, D)), full((D, D)), full((D, D)),             # wq, wk, wv (pre-transposed)
        full((1, D)), full((1, D)), full((1, D)),             # bq, bk, bv
        full((D, D)), full((1, D)),                           # wo (pre-transposed), bo
        full((D, dff)), full((1, dff)),                       # w1 (pre-transposed), b1
        full((dff, D)), full((1, D)),                         # w2 (pre-transposed), b2
        full((1, D)), full((1, D)),                           # ln1 gamma / beta
        full((1, D)), full((1, D)),                           # ln2 gamma / beta
    ]
    scratch_shapes = [
        pltpu.VMEM((nhead, S, head_dim), jnp.bfloat16),       # q head-major
        pltpu.VMEM((nhead, S, head_dim), jnp.bfloat16),       # k head-major
        pltpu.VMEM((nhead, S, head_dim), jnp.bfloat16),       # v head-major
        pltpu.VMEM((S, D), jnp.bfloat16),                     # attention context (S, D)
    ]

    kernel = functools.partial(decoder_kernel, nhead=nhead, head_dim=head_dim)
    return pl.pallas_call(
        kernel,
        out_shape=jax.ShapeDtypeStruct((B, S, D), x.dtype),
        grid=(B,),
        in_specs=in_specs,
        out_specs=pl.BlockSpec((None, S, D), lambda b: (b, 0, 0)),
        scratch_shapes=scratch_shapes,
        compiler_params=pltpu.CompilerParams(
            dimension_semantics=("parallel",),                # v7x: shard batch over 2 TCs
            vmem_limit_bytes=48 * 1024 * 1024,                # explicit, < v7x 64 MiB physical
        ),
    )(x,
      wq, wk, wv,
      bq, params["bk"], params["bv"],
      wo, params["bo"],
      w1, params["b1"], w2, params["b2"],
      params["g1"], params["beta1"], params["g2"], params["beta2"])


def decoder_reference(x, params, *, nhead):
    """Pure-JAX f32 reference mirroring DecoderLayer.forward (for a sanity check)."""
    B, S, D = x.shape
    hd = D // nhead
    q = x @ params["wq"] + params["bq"]
    k = x @ params["wk"] + params["bk"]
    v = x @ params["wv"] + params["bv"]
    qh = q.reshape(B, S, nhead, hd).transpose(0, 2, 1, 3)
    kh = k.reshape(B, S, nhead, hd).transpose(0, 2, 1, 3)
    vh = v.reshape(B, S, nhead, hd).transpose(0, 2, 1, 3)
    s = jnp.einsum("bhqd,bhkd->bhqk", qh, kh) / math.sqrt(hd)
    p = jax.nn.softmax(s, axis=-1)
    ctx = jnp.einsum("bhqk,bhkd->bhqd", p, vh)
    attn = ctx.transpose(0, 2, 1, 3).reshape(B, S, D) @ params["wo"] + params["bo"]
    x1 = _layer_norm(x + attn, params["g1"], params["beta1"])
    h1 = jnp.maximum(x1 @ params["w1"] + params["b1"], 0.0)
    x2 = _layer_norm(x1 + (h1 @ params["w2"] + params["b2"]),
                     params["g2"], params["beta2"])
    return x2


def init_params(key, d_model, nhead, dff):
    ks = jax.random.split(key, 8)
    s = 0.02
    # Weights are stored pre-transposed so the kernel computes x @ W (= x @ W_pt.T).
    return {
        "wq": s * jax.random.normal(ks[0], (d_model, d_model), jnp.float32),
        "wk": s * jax.random.normal(ks[1], (d_model, d_model), jnp.float32),
        "wv": s * jax.random.normal(ks[2], (d_model, d_model), jnp.float32),
        "bq": jnp.zeros((1, d_model), jnp.float32),
        "bk": jnp.zeros((1, d_model), jnp.float32),
        "bv": jnp.zeros((1, d_model), jnp.float32),
        "wo": s * jax.random.normal(ks[3], (d_model, d_model), jnp.float32),
        "bo": jnp.zeros((1, d_model), jnp.float32),
        "w1": s * jax.random.normal(ks[4], (d_model, dff), jnp.float32),
        "b1": jnp.zeros((1, dff), jnp.float32),
        "w2": s * jax.random.normal(ks[5], (dff, d_model), jnp.float32),
        "b2": jnp.zeros((1, d_model), jnp.float32),
        "g1": jnp.ones((1, d_model), jnp.float32),
        "beta1": jnp.zeros((1, d_model), jnp.float32),
        "g2": jnp.ones((1, d_model), jnp.float32),
        "beta2": jnp.zeros((1, d_model), jnp.float32),
    }


if __name__ == "__main__":
    # Small shapes consistent with the module: (batch, seq, d_model), nhead | d_model.
    B, S, D, NHEAD = 2, 8, 32, 4
    DFF = 4 * D

    key = jax.random.PRNGKey(0)
    kx, kp = jax.random.split(key)
    x = jax.random.normal(kx, (B, S, D), jnp.float32)
    params = init_params(kp, D, NHEAD, DFF)

    out = checkpointed_decoder(x, params, nhead=NHEAD)
    out = jax.block_until_ready(out)
    assert out.shape == (B, S, D) and out.dtype == jnp.float32
    assert bool(jnp.all(jnp.isfinite(out)))

    # Loose tolerance: kernel uses bf16 MXU operands + approx reciprocal, ref is f32.
    ref = decoder_reference(x, params, nhead=NHEAD)
    assert bool(jnp.allclose(out, ref, atol=5e-2, rtol=5e-2)), \
        float(jnp.max(jnp.abs(out - ref)))
    print("KERNEL_OK")
</pallas_src>

<mosaic_0001>
module attributes {stable_mosaic.version = 11 : i64} {
  func.func @decoder_kernel(%arg0: i32, %arg1: memref<1x8x32xf32, #tpu.memory_space<vmem>>, %arg2: memref<32x32xbf16, #tpu.memory_space<vmem>>, %arg3: memref<32x32xbf16, #tpu.memory_space<vmem>>, %arg4: memref<32x32xbf16, #tpu.memory_space<vmem>>, %arg5: memref<1x32xf32, #tpu.memory_space<vmem>>, %arg6: memref<1x32xf32, #tpu.memory_space<vmem>>, %arg7: memref<1x32xf32, #tpu.memory_space<vmem>>, %arg8: memref<32x32xbf16, #tpu.memory_space<vmem>>, %arg9: memref<1x32xf32, #tpu.memory_space<vmem>>, %arg10: memref<32x128xbf16, #tpu.memory_space<vmem>>, %arg11: memref<1x128xf32, #tpu.memory_space<vmem>>, %arg12: memref<128x32xbf16, #tpu.memory_space<vmem>>, %arg13: memref<1x32xf32, #tpu.memory_space<vmem>>, %arg14: memref<1x32xf32, #tpu.memory_space<vmem>>, %arg15: memref<1x32xf32, #tpu.memory_space<vmem>>, %arg16: memref<1x32xf32, #tpu.memory_space<vmem>>, %arg17: memref<1x32xf32, #tpu.memory_space<vmem>>, %arg18: memref<1x8x32xf32, #tpu.memory_space<vmem>>, %arg19: memref<4x8x8xbf16, #tpu.memory_space<vmem>>, %arg20: memref<4x8x8xbf16, #tpu.memory_space<vmem>>, %arg21: memref<4x8x8xbf16, #tpu.memory_space<vmem>>, %arg22: memref<8x32xbf16, #tpu.memory_space<vmem>>) attributes {dimension_semantics = [#tpu.dimension_semantics<parallel>], iteration_bounds = array<i64: 2>, scalar_prefetch = 0 : i64, scratch_operands = 4 : i64, tpu.core_type = #tpu.core_type<tc>, window_params = [{transform_indices = @transform_0, window_bounds = array<i64: 1, 8, 32>}, {pipeline_mode = #tpu.pipeline_mode<synchronous>, transform_indices = @transform_1, window_bounds = array<i64: 32, 32>}, {pipeline_mode = #tpu.pipeline_mode<synchronous>, transform_indices = @transform_2, window_bounds = array<i64: 32, 32>}, {pipeline_mode = #tpu.pipeline_mode<synchronous>, transform_indices = @transform_3, window_bounds = array<i64: 32, 32>}, {pipeline_mode = #tpu.pipeline_mode<synchronous>, transform_indices = @transform_4, window_bounds = array<i64: 1, 32>}, {pipeline_mode = #tpu.pipeline_mode<synchronous>, transform_indices = @transform_5, window_bounds = array<i64: 1, 32>}, {pipeline_mode = #tpu.pipeline_mode<synchronous>, transform_indices = @transform_6, window_bounds = array<i64: 1, 32>}, {pipeline_mode = #tpu.pipeline_mode<synchronous>, transform_indices = @transform_7, window_bounds = array<i64: 32, 32>}, {pipeline_mode = #tpu.pipeline_mode<synchronous>, transform_indices = @transform_8, window_bounds = array<i64: 1, 32>}, {pipeline_mode = #tpu.pipeline_mode<synchronous>, transform_indices = @transform_9, window_bounds = array<i64: 32, 128>}, {pipeline_mode = #tpu.pipeline_mode<synchronous>, transform_indices = @transform_10, window_bounds = array<i64: 1, 128>}, {pipeline_mode = #tpu.pipeline_mode<synchronous>, transform_indices = @transform_11, window_bounds = array<i64: 128, 32>}, {pipeline_mode = #tpu.pipeline_mode<synchronous>, transform_indices = @transform_12, window_bounds = array<i64: 1, 32>}, {pipeline_mode = #tpu.pipeline_mode<synchronous>, transform_indices = @transform_13, window_bounds = array<i64: 1, 32>}, {pipeline_mode = #tpu.pipeline_mode<synchronous>, transform_indices = @transform_14, window_bounds = array<i64: 1, 32>}, {pipeline_mode = #tpu.pipeline_mode<synchronous>, transform_indices = @transform_15, window_bounds = array<i64: 1, 32>}, {pipeline_mode = #tpu.pipeline_mode<synchronous>, transform_indices = @transform_16, window_bounds = array<i64: 1, 32>}, {transform_indices = @transform_17, window_bounds = array<i64: 1, 8, 32>}]} {
    %c0 = arith.constant 0 : index
    %c0_0 = arith.constant 0 : index
    %c0_1 = arith.constant 0 : index
    %0 = vector.load %arg1[%c0, %c0_0, %c0_1] : memref<1x8x32xf32, #tpu.memory_space<vmem>>, vector<1x8x32xf32>
    %1 = vector.shape_cast %0 : vector<1x8x32xf32> to vector<8x32xf32>
    %2 = arith.truncf %1 : vector<8x32xf32> to vector<8x32xbf16>
    %c0_2 = arith.constant 0 : index
    %c0_3 = arith.constant 0 : index
    %3 = vector.load %arg2[%c0_2, %c0_3] : memref<32x32xbf16, #tpu.memory_space<vmem>>, vector<32x32xbf16>
    %cst = arith.constant dense<0.000000e+00> : vector<8x32xf32>
    %4 = tpu.matmul %2, %3, %cst {dimension_numbers = #tpu.dot_dimension_numbers<[1], [0], [0], [1], [0, 0, 1, 1], [], []>} : vector<8x32xbf16>, vector<32x32xbf16>, vector<8x32xf32> -> vector<8x32xf32>
    %c0_4 = arith.constant 0 : index
    %c0_5 = arith.constant 0 : index
    %5 = vector.load %arg5[%c0_4, %c0_5] : memref<1x32xf32, #tpu.memory_space<vmem>>, vector<1x32xf32>
    %6 = vector.broadcast %5 : vector<1x32xf32> to vector<8x32xf32>
    %7 = arith.addf %4, %6 : vector<8x32xf32>
    %c0_6 = arith.constant 0 : index
    %c0_7 = arith.constant 0 : index
    %8 = vector.load %arg3[%c0_6, %c0_7] : memref<32x32xbf16, #tpu.memory_space<vmem>>, vector<32x32xbf16>
    %cst_8 = arith.constant dense<0.000000e+00> : vector<8x32xf32>
    %9 = tpu.matmul %2, %8, %cst_8 {dimension_numbers = #tpu.dot_dimension_numbers<[1], [0], [0], [1], [0, 0, 1, 1], [], []>} : vector<8x32xbf16>, vector<32x32xbf16>, vector<8x32xf32> -> vector<8x32xf32>
    %c0_9 = arith.constant 0 : index
    %c0_10 = arith.constant 0 : index
    %10 = vector.load %arg6[%c0_9, %c0_10] : memref<1x32xf32, #tpu.memory_space<vmem>>, vector<1x32xf32>
    %11 = vector.broadcast %10 : vector<1x32xf32> to vector<8x32xf32>
    %12 = arith.addf %9, %11 : vector<8x32xf32>
    %c0_11 = arith.constant 0 : index
    %c0_12 = arith.constant 0 : index
    %13 = vector.load %arg4[%c0_11, %c0_12] : memref<32x32xbf16, #tpu.memory_space<vmem>>, vector<32x32xbf16>
    %cst_13 = arith.constant dense<0.000000e+00> : vector<8x32xf32>
    %14 = tpu.matmul %2, %13, %cst_13 {dimension_numbers = #tpu.dot_dimension_numbers<[1], [0], [0], [1], [0, 0, 1, 1], [], []>} : vector<8x32xbf16>, vector<32x32xbf16>, vector<8x32xf32> -> vector<8x32xf32>
    %c0_14 = arith.constant 0 : index
    %c0_15 = arith.constant 0 : index
    %15 = vector.load %arg7[%c0_14, %c0_15] : memref<1x32xf32, #tpu.memory_space<vmem>>, vector<1x32xf32>
    %16 = vector.broadcast %15 : vector<1x32xf32> to vector<8x32xf32>
    %17 = arith.addf %14, %16 : vector<8x32xf32>
    %18 = vector.extract_strided_slice %7 {offsets = [0, 0], sizes = [8, 8], strides = [1, 1]} : vector<8x32xf32> to vector<8x8xf32>
    %19 = arith.truncf %18 : vector<8x8xf32> to vector<8x8xbf16>
    %c0_16 = arith.constant 0 : index
    %c0_17 = arith.constant 0 : index
    %c0_18 = arith.constant 0 : index
    %20 = vector.load %arg19[%c0_16, %c0_17, %c0_18] : memref<4x8x8xbf16, #tpu.memory_space<vmem>>, vector<1x8x8xbf16>
    %21 = vector.shape_cast %20 : vector<1x8x8xbf16> to vector<8x8xbf16>
    %22 = vector.shape_cast %19 : vector<8x8xbf16> to vector<1x8x8xbf16>
    tpu.vector_store %arg19[%c0_16, %c0_17, %c0_18], %22 {strides = array<i32>} : memref<4x8x8xbf16, #tpu.memory_space<vmem>>, vector<1x8x8xbf16>,
    %23 = vector.extract_strided_slice %12 {offsets = [0, 0], sizes = [8, 8], strides = [1, 1]} : vector<8x32xf32> to vector<8x8xf32>
    %24 = arith.truncf %23 : vector<8x8xf32> to vector<8x8xbf16>
    %c0_19 = arith.constant 0 : index
    %c0_20 = arith.constant 0 : index
    %c0_21 = arith.constant 0 : index
    %25 = vector.load %arg20[%c0_19, %c0_20, %c0_21] : memref<4x8x8xbf16, #tpu.memory_space<vmem>>, vector<1x8x8xbf16>
    %26 = vector.shape_cast %25 : vector<1x8x8xbf16> to vector<8x8xbf16>
    %27 = vector.shape_cast %24 : vector<8x8xbf16> to vector<1x8x8xbf16>
    tpu.vector_store %arg20[%c0_19, %c0_20, %c0_21], %27 {strides = array<i32>} : memref<4x8x8xbf16, #tpu.memory_space<vmem>>, vector<1x8x8xbf16>,
    %28 = vector.extract_strided_slice %17 {offsets = [0, 0], sizes = [8, 8], strides = [1, 1]} : vector<8x32xf32> to vector<8x8xf32>
    %29 = arith.truncf %28 : vector<8x8xf32> to vector<8x8xbf16>
    %c0_22 = arith.constant 0 : index
    %c0_23 = arith.constant 0 : index
    %c0_24 = arith.constant 0 : index
    %30 = vector.load %arg21[%c0_22, %c0_23, %c0_24] : memref<4x8x8xbf16, #tpu.memory_space<vmem>>, vector<1x8x8xbf16>
    %31 = vector.shape_cast %30 : vector<1x8x8xbf16> to vector<8x8xbf16>
    %32 = vector.shape_cast %29 : vector<8x8xbf16> to vector<1x8x8xbf16>
    tpu.vector_store %arg21[%c0_22, %c0_23, %c0_24], %32 {strides = array<i32>} : memref<4x8x8xbf16, #tpu.memory_space<vmem>>, vector<1x8x8xbf16>,
    %33 = vector.extract_strided_slice %7 {offsets = [0, 8], sizes = [8, 8], strides = [1, 1]} : vector<8x32xf32> to vector<8x8xf32>
    %34 = arith.truncf %33 : vector<8x8xf32> to vector<8x8xbf16>
    %c1 = arith.constant 1 : index
    %c0_25 = arith.constant 0 : index
    %c0_26 = arith.constant 0 : index
    %35 = vector.load %arg19[%c1, %c0_25, %c0_26] : memref<4x8x8xbf16, #tpu.memory_space<vmem>>, vector<1x8x8xbf16>
    %36 = vector.shape_cast %35 : vector<1x8x8xbf16> to vector<8x8xbf16>
    %37 = vector.shape_cast %34 : vector<8x8xbf16> to vector<1x8x8xbf16>
    tpu.vector_store %arg19[%c1, %c0_25, %c0_26], %37 {strides = array<i32>} : memref<4x8x8xbf16, #tpu.memory_space<vmem>>, vector<1x8x8xbf16>,
    %38 = vector.extract_strided_slice %12 {offsets = [0, 8], sizes = [8, 8], strides = [1, 1]} : vector<8x32xf32> to vector<8x8xf32>
    %39 = arith.truncf %38 : vector<8x8xf32> to vector<8x8xbf16>
    %c1_27 = arith.constant 1 : index
    %c0_28 = arith.constant 0 : index
    %c0_29 = arith.constant 0 : index
    %40 = vector.load %arg20[%c1_27, %c0_28, %c0_29] : memref<4x8x8xbf16, #tpu.memory_space<vmem>>, vector<1x8x8xbf16>
    %41 = vector.shape_cast %40 : vector<1x8x8xbf16> to vector<8x8xbf16>
    %42 = vector.shape_cast %39 : vector<8x8xbf16> to vector<1x8x8xbf16>
    tpu.vector_store %arg20[%c1_27, %c0_28, %c0_29], %42 {strides = array<i32>} : memref<4x8x8xbf16, #tpu.memory_space<vmem>>, vector<1x8x8xbf16>,
    %43 = vector.extract_strided_slice %17 {offsets = [0, 8], sizes = [8, 8], strides = [1, 1]} : vector<8x32xf32> to vector<8x8xf32>
    %44 = arith.truncf %43 : vector<8x8xf32> to vector<8x8xbf16>
    %c1_30 = arith.constant 1 : index
    %c0_31 = arith.constant 0 : index
    %c0_32 = arith.constant 0 : index
    %45 = vector.load %arg21[%c1_30, %c0_31, %c0_32] : memref<4x8x8xbf16, #tpu.memory_space<vmem>>, vector<1x8x8xbf16>
    %46 = vector.shape_cast %45 : vector<1x8x8xbf16> to vector<8x8xbf16>
    %47 = vector.shape_cast %44 : vector<8x8xbf16> to vector<1x8x8xbf16>
    tpu.vector_store %arg21[%c1_30, %c0_31, %c0_32], %47 {strides = array<i32>} : memref<4x8x8xbf16, #tpu.memory_space<vmem>>, vector<1x8x8xbf16>,
    %48 = vector.extract_strided_slice %7 {offsets = [0, 16], sizes = [8, 8], strides = [1, 1]} : vector<8x32xf32> to vector<8x8xf32>
    %49 = arith.truncf %48 : vector<8x8xf32> to vector<8x8xbf16>
    %c2 = arith.constant 2 : index
    %c0_33 = arith.constant 0 : index
    %c0_34 = arith.constant 0 : index
    %50 = vector.load %arg19[%c2, %c0_33, %c0_34] : memref<4x8x8xbf16, #tpu.memory_space<vmem>>, vector<1x8x8xbf16>
    %51 = vector.shape_cast %50 : vector<1x8x8xbf16> to vector<8x8xbf16>
    %52 = vector.shape_cast %49 : vector<8x8xbf16> to vector<1x8x8xbf16>
    tpu.vector_store %arg19[%c2, %c0_33, %c0_34], %52 {strides = array<i32>} : memref<4x8x8xbf16, #tpu.memory_space<vmem>>, vector<1x8x8xbf16>,
    %53 = vector.extract_strided_slice %12 {offsets = [0, 16], sizes = [8, 8], strides = [1, 1]} : vector<8x32xf32> to vector<8x8xf32>
    %54 = arith.truncf %53 : vector<8x8xf32> to vector<8x8xbf16>
    %c2_35 = arith.constant 2 : index
    %c0_36 = arith.constant 0 : index
    %c0_37 = arith.constant 0 : index
    %55 = vector.load %arg20[%c2_35, %c0_36, %c0_37] : memref<4x8x8xbf16, #tpu.memory_space<vmem>>, vector<1x8x8xbf16>
    %56 = vector.shape_cast %55 : vector<1x8x8xbf16> to vector<8x8xbf16>
    %57 = vector.shape_cast %54 : vector<8x8xbf16> to vector<1x8x8xbf16>
    tpu.vector_store %arg20[%c2_35, %c0_36, %c0_37], %57 {strides = array<i32>} : memref<4x8x8xbf16, #tpu.memory_space<vmem>>, vector<1x8x8xbf16>,
    %58 = vector.extract_strided_slice %17 {offsets = [0, 16], sizes = [8, 8], strides = [1, 1]} : vector<8x32xf32> to vector<8x8xf32>
    %59 = arith.truncf %58 : vector<8x8xf32> to vector<8x8xbf16>
    %c2_38 = arith.constant 2 : index
    %c0_39 = arith.constant 0 : index
    %c0_40 = arith.constant 0 : index
    %60 = vector.load %arg21[%c2_38, %c0_39, %c0_40] : memref<4x8x8xbf16, #tpu.memory_space<vmem>>, vector<1x8x8xbf16>
    %61 = vector.shape_cast %60 : vector<1x8x8xbf16> to vector<8x8xbf16>
    %62 = vector.shape_cast %59 : vector<8x8xbf16> to vector<1x8x8xbf16>
    tpu.vector_store %arg21[%c2_38, %c0_39, %c0_40], %62 {strides = array<i32>} : memref<4x8x8xbf16, #tpu.memory_space<vmem>>, vector<1x8x8xbf16>,
    %63 = vector.extract_strided_slice %7 {offsets = [0, 24], sizes = [8, 8], strides = [1, 1]} : vector<8x32xf32> to vector<8x8xf32>
    %64 = arith.truncf %63 : vector<8x8xf32> to vector<8x8xbf16>
    %c3 = arith.constant 3 : index
    %c0_41 = arith.constant 0 : index
    %c0_42 = arith.constant 0 : index
    %65 = vector.load %arg19[%c3, %c0_41, %c0_42] : memref<4x8x8xbf16, #tpu.memory_space<vmem>>, vector<1x8x8xbf16>
    %66 = vector.shape_cast %65 : vector<1x8x8xbf16> to vector<8x8xbf16>
    %67 = vector.shape_cast %64 : vector<8x8xbf16> to vector<1x8x8xbf16>
    tpu.vector_store %arg19[%c3, %c0_41, %c0_42], %67 {strides = array<i32>} : memref<4x8x8xbf16, #tpu.memory_space<vmem>>, vector<1x8x8xbf16>,
    %68 = vector.extract_strided_slice %12 {offsets = [0, 24], sizes = [8, 8], strides = [1, 1]} : vector<8x32xf32> to vector<8x8xf32>
    %69 = arith.truncf %68 : vector<8x8xf32> to vector<8x8xbf16>
    %c3_43 = arith.constant 3 : index
    %c0_44 = arith.constant 0 : index
    %c0_45 = arith.constant 0 : index
    %70 = vector.load %arg20[%c3_43, %c0_44, %c0_45] : memref<4x8x8xbf16, #tpu.memory_space<vmem>>, vector<1x8x8xbf16>
    %71 = vector.shape_cast %70 : vector<1x8x8xbf16> to vector<8x8xbf16>
    %72 = vector.shape_cast %69 : vector<8x8xbf16> to vector<1x8x8xbf16>
    tpu.vector_store %arg20[%c3_43, %c0_44, %c0_45], %72 {strides = array<i32>} : memref<4x8x8xbf16, #tpu.memory_space<vmem>>, vector<1x8x8xbf16>,
    %73 = vector.extract_strided_slice %17 {offsets = [0, 24], sizes = [8, 8], strides = [1, 1]} : vector<8x32xf32> to vector<8x8xf32>
    %74 = arith.truncf %73 : vector<8x8xf32> to vector<8x8xbf16>
    %c3_46 = arith.constant 3 : index
    %c0_47 = arith.constant 0 : index
    %c0_48 = arith.constant 0 : index
    %75 = vector.load %arg21[%c3_46, %c0_47, %c0_48] : memref<4x8x8xbf16, #tpu.memory_space<vmem>>, vector<1x8x8xbf16>
    %76 = vector.shape_cast %75 : vector<1x8x8xbf16> to vector<8x8xbf16>
    %77 = vector.shape_cast %74 : vector<8x8xbf16> to vector<1x8x8xbf16>
    tpu.vector_store %arg21[%c3_46, %c0_47, %c0_48], %77 {strides = array<i32>} : memref<4x8x8xbf16, #tpu.memory_space<vmem>>, vector<1x8x8xbf16>,
    %c0_49 = arith.constant 0 : index
    %c0_50 = arith.constant 0 : index
    %c0_51 = arith.constant 0 : index
    %78 = vector.load %arg19[%c0_49, %c0_50, %c0_51] : memref<4x8x8xbf16, #tpu.memory_space<vmem>>, vector<4x8x8xbf16>
    %c0_52 = arith.constant 0 : index
    %c0_53 = arith.constant 0 : index
    %c0_54 = arith.constant 0 : index
    %79 = vector.load %arg20[%c0_52, %c0_53, %c0_54] : memref<4x8x8xbf16, #tpu.memory_space<vmem>>, vector<4x8x8xbf16>
    "tpu.trace_start"() <{level = 10 : i32, message = "hqd,hkd->hqk"}> : () -> ()
    %cst_55 = arith.constant dense<0.000000e+00> : vector<4x8x8xf32>
    %80 = tpu.matmul %78, %79, %cst_55 {dimension_numbers = #tpu.dot_dimension_numbers<[2], [2], [1], [1], [0, 0, 0, 1, 1, 1], [0], [0]>} : vector<4x8x8xbf16>, vector<4x8x8xbf16>, vector<4x8x8xf32> -> vector<4x8x8xf32>
    "tpu.trace_stop"() : () -> ()
    %cst_56 = arith.constant dense<0xFF800000> : vector<4x8xf32>
    %81 = vector.multi_reduction <maximumf>, %80, %cst_56 [2] : vector<4x8x8xf32> to vector<4x8xf32>
    %82 = vector.shape_cast %81 : vector<4x8xf32> to vector<4x8x1xf32>
    %83 = vector.broadcast %82 : vector<4x8x1xf32> to vector<4x8x8xf32>
    %84 = arith.subf %80, %83 : vector<4x8x8xf32>
    %85 = math.exp %84 : vector<4x8x8xf32>
    %cst_57 = arith.constant dense<0.000000e+00> : vector<4x8xf32>
    %86 = vector.multi_reduction <add>, %85, %cst_57 [2] : vector<4x8x8xf32> to vector<4x8xf32>
    %87 = vector.shape_cast %86 : vector<4x8xf32> to vector<4x8x1xf32>
    %88 = arith.truncf %85 : vector<4x8x8xf32> to vector<4x8x8xbf16>
    %c0_58 = arith.constant 0 : index
    %c0_59 = arith.constant 0 : index
    %c0_60 = arith.constant 0 : index
    %89 = vector.load %arg21[%c0_58, %c0_59, %c0_60] : memref<4x8x8xbf16, #tpu.memory_space<vmem>>, vector<4x8x8xbf16>
    "tpu.trace_start"() <{level = 10 : i32, message = "hqk,hkd->hqd"}> : () -> ()
    %cst_61 = arith.constant dense<0.000000e+00> : vector<4x8x8xf32>
    %90 = tpu.matmul %88, %89, %cst_61 {dimension_numbers = #tpu.dot_dimension_numbers<[2], [1], [1], [2], [0, 0, 0, 1, 1, 2], [0], [0]>} : vector<4x8x8xbf16>, vector<4x8x8xbf16>, vector<4x8x8xf32> -> vector<4x8x8xf32>
    "tpu.trace_stop"() : () -> ()
    %91 = tpu.reciprocal %87 {approx = true} : vector<4x8x1xf32> -> vector<4x8x1xf32>
    %92 = vector.broadcast %91 : vector<4x8x1xf32> to vector<4x8x8xf32>
    %93 = arith.mulf %90, %92 : vector<4x8x8xf32>
    %94 = vector.extract_strided_slice %93 {offsets = [0, 0, 0], sizes = [1, 8, 8], strides = [1, 1, 1]} : vector<4x8x8xf32> to vector<1x8x8xf32>
    %95 = vector.shape_cast %94 : vector<1x8x8xf32> to vector<8x8xf32>
    %96 = arith.truncf %95 : vector<8x8xf32> to vector<8x8xbf16>
    %c0_62 = arith.constant 0 : index
    %c0_63 = arith.constant 0 : index
    %97 = vector.load %arg22[%c0_62, %c0_63] : memref<8x32xbf16, #tpu.memory_space<vmem>>, vector<8x8xbf16>
    tpu.vector_store %arg22[%c0_62, %c0_63], %96 {strides = array<i32>} : memref<8x32xbf16, #tpu.memory_space<vmem>>, vector<8x8xbf16>,
    %98 = vector.extract_strided_slice %93 {offsets = [1, 0, 0], sizes = [1, 8, 8], strides = [1, 1, 1]} : vector<4x8x8xf32> to vector<1x8x8xf32>
    %99 = vector.shape_cast %98 : vector<1x8x8xf32> to vector<8x8xf32>
    %100 = arith.truncf %99 : vector<8x8xf32> to vector<8x8xbf16>
    %c0_64 = arith.constant 0 : index
    %c8 = arith.constant 8 : index
    %101 = vector.load %arg22[%c0_64, %c8] : memref<8x32xbf16, #tpu.memory_space<vmem>>, vector<8x8xbf16>
    tpu.vector_store %arg22[%c0_64, %c8], %100 {strides = array<i32>} : memref<8x32xbf16, #tpu.memory_space<vmem>>, vector<8x8xbf16>,
    %102 = vector.extract_strided_slice %93 {offsets = [2, 0, 0], sizes = [1, 8, 8], strides = [1, 1, 1]} : vector<4x8x8xf32> to vector<1x8x8xf32>
    %103 = vector.shape_cast %102 : vector<1x8x8xf32> to vector<8x8xf32>
    %104 = arith.truncf %103 : vector<8x8xf32> to vector<8x8xbf16>
    %c0_65 = arith.constant 0 : index
    %c16 = arith.constant 16 : index
    %105 = vector.load %arg22[%c0_65, %c16] : memref<8x32xbf16, #tpu.memory_space<vmem>>, vector<8x8xbf16>
    tpu.vector_store %arg22[%c0_65, %c16], %104 {strides = array<i32>} : memref<8x32xbf16, #tpu.memory_space<vmem>>, vector<8x8xbf16>,
    %106 = vector.extract_strided_slice %93 {offsets = [3, 0, 0], sizes = [1, 8, 8], strides = [1, 1, 1]} : vector<4x8x8xf32> to vector<1x8x8xf32>
    %107 = vector.shape_cast %106 : vector<1x8x8xf32> to vector<8x8xf32>
    %108 = arith.truncf %107 : vector<8x8xf32> to vector<8x8xbf16>
    %c0_66 = arith.constant 0 : index
    %c24 = arith.constant 24 : index
    %109 = vector.load %arg22[%c0_66, %c24] : memref<8x32xbf16, #tpu.memory_space<vmem>>, vector<8x8xbf16>
    tpu.vector_store %arg22[%c0_66, %c24], %108 {strides = array<i32>} : memref<8x32xbf16, #tpu.memory_space<vmem>>, vector<8x8xbf16>,
    %c0_67 = arith.constant 0 : index
    %c0_68 = arith.constant 0 : index
    %110 = vector.load %arg22[%c0_67, %c0_68] : memref<8x32xbf16, #tpu.memory_space<vmem>>, vector<8x32xbf16>
    %c0_69 = arith.constant 0 : index
    %c0_70 = arith.constant 0 : index
    %111 = vector.load %arg8[%c0_69, %c0_70] : memref<32x32xbf16, #tpu.memory_space<vmem>>, vector<32x32xbf16>
    %cst_71 = arith.constant dense<0.000000e+00> : vector<8x32xf32>
    %112 = tpu.matmul %110, %111, %cst_71 {dimension_numbers = #tpu.dot_dimension_numbers<[1], [0], [0], [1], [0, 0, 1, 1], [], []>} : vector<8x32xbf16>, vector<32x32xbf16>, vector<8x32xf32> -> vector<8x32xf32>
    %c0_72 = arith.constant 0 : index
    %c0_73 = arith.constant 0 : index
    %113 = vector.load %arg9[%c0_72, %c0_73] : memref<1x32xf32, #tpu.memory_space<vmem>>, vector<1x32xf32>
    %114 = vector.broadcast %113 : vector<1x32xf32> to vector<8x32xf32>
    %115 = arith.addf %112, %114 : vector<8x32xf32>
    %116 = arith.addf %1, %115 : vector<8x32xf32>
    %c0_74 = arith.constant 0 : index
    %c0_75 = arith.constant 0 : index
    %117 = vector.load %arg14[%c0_74, %c0_75] : memref<1x32xf32, #tpu.memory_space<vmem>>, vector<1x32xf32>
    %c0_76 = arith.constant 0 : index
    %c0_77 = arith.constant 0 : index
    %118 = vector.load %arg15[%c0_76, %c0_77] : memref<1x32xf32, #tpu.memory_space<vmem>>, vector<1x32xf32>
    %cst_78 = arith.constant dense<0.000000e+00> : vector<8xf32>
    %119 = vector.multi_reduction <add>, %116, %cst_78 [1] : vector<8x32xf32> to vector<8xf32>
    %120 = vector.shape_cast %119 : vector<8xf32> to vector<8x1xf32>
    %cst_79 = arith.constant 3.200000e+01 : f32
    %121 = vector.broadcast %cst_79 : f32 to vector<8x1xf32>
    %122 = arith.divf %120, %121 : vector<8x1xf32>
    %123 = vector.broadcast %122 : vector<8x1xf32> to vector<8x32xf32>
    %124 = arith.subf %116, %123 : vector<8x32xf32>
    %125 = arith.mulf %124, %124 : vector<8x32xf32>
    %cst_80 = arith.constant dense<0.000000e+00> : vector<8xf32>
    %126 = vector.multi_reduction <add>, %125, %cst_80 [1] : vector<8x32xf32> to vector<8xf32>
    %127 = vector.shape_cast %126 : vector<8xf32> to vector<8x1xf32>
    %cst_81 = arith.constant 3.200000e+01 : f32
    %128 = vector.broadcast %cst_81 : f32 to vector<8x1xf32>
    %129 = arith.divf %127, %128 : vector<8x1xf32>
    %130 = vector.broadcast %122 : vector<8x1xf32> to vector<8x32xf32>
    %131 = arith.subf %116, %130 : vector<8x32xf32>
    %cst_82 = arith.constant 9.99999974E-6 : f32
    %132 = vector.broadcast %cst_82 : f32 to vector<8x1xf32>
    %133 = arith.addf %129, %132 : vector<8x1xf32>
    %134 = math.rsqrt %133 : vector<8x1xf32>
    %135 = vector.broadcast %134 : vector<8x1xf32> to vector<8x32xf32>
    %136 = arith.mulf %131, %135 : vector<8x32xf32>
    %137 = vector.broadcast %117 : vector<1x32xf32> to vector<8x32xf32>
    %138 = arith.mulf %136, %137 : vector<8x32xf32>
    %139 = vector.broadcast %118 : vector<1x32xf32> to vector<8x32xf32>
    %140 = arith.addf %138, %139 : vector<8x32xf32>
    %141 = arith.truncf %140 : vector<8x32xf32> to vector<8x32xbf16>
    %c0_83 = arith.constant 0 : index
    %c0_84 = arith.constant 0 : index
    %142 = vector.load %arg10[%c0_83, %c0_84] : memref<32x128xbf16, #tpu.memory_space<vmem>>, vector<32x128xbf16>
    %cst_85 = arith.constant dense<0.000000e+00> : vector<8x128xf32>
    %143 = tpu.matmul %141, %142, %cst_85 {dimension_numbers = #tpu.dot_dimension_numbers<[1], [0], [0], [1], [0, 0, 1, 1], [], []>} : vector<8x32xbf16>, vector<32x128xbf16>, vector<8x128xf32> -> vector<8x128xf32>
    %c0_86 = arith.constant 0 : index
    %c0_87 = arith.constant 0 : index
    %144 = vector.load %arg11[%c0_86, %c0_87] : memref<1x128xf32, #tpu.memory_space<vmem>>, vector<1x128xf32>
    %145 = vector.broadcast %144 : vector<1x128xf32> to vector<8x128xf32>
    %146 = arith.addf %143, %145 : vector<8x128xf32>
    %cst_88 = arith.constant 0.000000e+00 : f32
    %147 = vector.broadcast %cst_88 : f32 to vector<8x128xf32>
    %148 = arith.maximumf %146, %147 : vector<8x128xf32>
    %149 = arith.truncf %148 : vector<8x128xf32> to vector<8x128xbf16>
    %c0_89 = arith.constant 0 : index
    %c0_90 = arith.constant 0 : index
    %150 = vector.load %arg12[%c0_89, %c0_90] : memref<128x32xbf16, #tpu.memory_space<vmem>>, vector<128x32xbf16>
    %cst_91 = arith.constant dense<0.000000e+00> : vector<8x32xf32>
    %151 = tpu.matmul %149, %150, %cst_91 {dimension_numbers = #tpu.dot_dimension_numbers<[1], [0], [0], [1], [0, 0, 1, 1], [], []>} : vector<8x128xbf16>, vector<128x32xbf16>, vector<8x32xf32> -> vector<8x32xf32>
    %c0_92 = arith.constant 0 : index
    %c0_93 = arith.constant 0 : index
    %152 = vector.load %arg13[%c0_92, %c0_93] : memref<1x32xf32, #tpu.memory_space<vmem>>, vector<1x32xf32>
    %153 = vector.broadcast %152 : vector<1x32xf32> to vector<8x32xf32>
    %154 = arith.addf %151, %153 : vector<8x32xf32>
    %155 = arith.addf %140, %154 : vector<8x32xf32>
    %c0_94 = arith.constant 0 : index
    %c0_95 = arith.constant 0 : index
    %156 = vector.load %arg16[%c0_94, %c0_95] : memref<1x32xf32, #tpu.memory_space<vmem>>, vector<1x32xf32>
    %c0_96 = arith.constant 0 : index
    %c0_97 = arith.constant 0 : index
    %157 = vector.load %arg17[%c0_96, %c0_97] : memref<1x32xf32, #tpu.memory_space<vmem>>, vector<1x32xf32>
    %cst_98 = arith.constant dense<0.000000e+00> : vector<8xf32>
    %158 = vector.multi_reduction <add>, %155, %cst_98 [1] : vector<8x32xf32> to vector<8xf32>
    %159 = vector.shape_cast %158 : vector<8xf32> to vector<8x1xf32>
    %cst_99 = arith.constant 3.200000e+01 : f32
    %160 = vector.broadcast %cst_99 : f32 to vector<8x1xf32>
    %161 = arith.divf %159, %160 : vector<8x1xf32>
    %162 = vector.broadcast %161 : vector<8x1xf32> to vector<8x32xf32>
    %163 = arith.subf %155, %162 : vector<8x32xf32>
    %164 = arith.mulf %163, %163 : vector<8x32xf32>
    %cst_100 = arith.constant dense<0.000000e+00> : vector<8xf32>
    %165 = vector.multi_reduction <add>, %164, %cst_100 [1] : vector<8x32xf32> to vector<8xf32>
    %166 = vector.shape_cast %165 : vector<8xf32> to vector<8x1xf32>
    %cst_101 = arith.constant 3.200000e+01 : f32
    %167 = vector.broadcast %cst_101 : f32 to vector<8x1xf32>
    %168 = arith.divf %166, %167 : vector<8x1xf32>
    %169 = vector.broadcast %161 : vector<8x1xf32> to vector<8x32xf32>
    %170 = arith.subf %155, %169 : vector<8x32xf32>
    %cst_102 = arith.constant 9.99999974E-6 : f32
    %171 = vector.broadcast %cst_102 : f32 to vector<8x1xf32>
    %172 = arith.addf %168, %171 : vector<8x1xf32>
    %173 = math.rsqrt %172 : vector<8x1xf32>
    %174 = vector.broadcast %173 : vector<8x1xf32> to vector<8x32xf32>
    %175 = arith.mulf %170, %174 : vector<8x32xf32>
    %176 = vector.broadcast %156 : vector<1x32xf32> to vector<8x32xf32>
    %177 = arith.mulf %175, %176 : vector<8x32xf32>
    %178 = vector.broadcast %157 : vector<1x32xf32> to vector<8x32xf32>
    %179 = arith.addf %177, %178 : vector<8x32xf32>
    %c0_103 = arith.constant 0 : index
    %c0_104 = arith.constant 0 : index
    %c0_105 = arith.constant 0 : index
    %180 = vector.load %arg18[%c0_103, %c0_104, %c0_105] : memref<1x8x32xf32, #tpu.memory_space<vmem>>, vector<1x8x32xf32>
    %181 = vector.shape_cast %180 : vector<1x8x32xf32> to vector<8x32xf32>
    %182 = vector.shape_cast %179 : vector<8x32xf32> to vector<1x8x32xf32>
    tpu.vector_store %arg18[%c0_103, %c0_104, %c0_105], %182 {strides = array<i32>} : memref<1x8x32xf32, #tpu.memory_space<vmem>>, vector<1x8x32xf32>,
    return
  }
  func.func @transform_0(%arg0: i32) -> (i32, i32, i32) {
    %c0_i32 = arith.constant 0 : i32
    %c0_i32_0 = arith.constant 0 : i32
    %c0_i32_1 = arith.constant 0 : i32
    return %arg0, %c0_i32, %c0_i32_0 : i32, i32, i32
  }
  func.func @transform_1(%arg0: i32) -> (i32, i32) {
    %c0_i32 = arith.constant 0 : i32
    %c0_i32_0 = arith.constant 0 : i32
    %c0_i32_1 = arith.constant 0 : i32
    return %c0_i32, %c0_i32_0 : i32, i32
  }
  func.func @transform_2(%arg0: i32) -> (i32, i32) {
    %c0_i32 = arith.constant 0 : i32
    %c0_i32_0 = arith.constant 0 : i32
    %c0_i32_1 = arith.constant 0 : i32
    return %c0_i32, %c0_i32_0 : i32, i32
  }
  func.func @transform_3(%arg0: i32) -> (i32, i32) {
    %c0_i32 = arith.constant 0 : i32
    %c0_i32_0 = arith.constant 0 : i32
    %c0_i32_1 = arith.constant 0 : i32
    return %c0_i32, %c0_i32_0 : i32, i32
  }
  func.func @transform_4(%arg0: i32) -> (i32, i32) {
    %c0_i32 = arith.constant 0 : i32
    %c0_i32_0 = arith.constant 0 : i32
    %c0_i32_1 = arith.constant 0 : i32
    return %c0_i32, %c0_i32_0 : i32, i32
  }
  func.func @transform_5(%arg0: i32) -> (i32, i32) {
    %c0_i32 = arith.constant 0 : i32
    %c0_i32_0 = arith.constant 0 : i32
    %c0_i32_1 = arith.constant 0 : i32
    return %c0_i32, %c0_i32_0 : i32, i32
  }
  func.func @transform_6(%arg0: i32) -> (i32, i32) {
    %c0_i32 = arith.constant 0 : i32
    %c0_i32_0 = arith.constant 0 : i32
    %c0_i32_1 = arith.constant 0 : i32
    return %c0_i32, %c0_i32_0 : i32, i32
  }
  func.func @transform_7(%arg0: i32) -> (i32, i32) {
    %c0_i32 = arith.constant 0 : i32
    %c0_i32_0 = arith.constant 0 : i32
    %c0_i32_1 = arith.constant 0 : i32
    return %c0_i32, %c0_i32_0 : i32, i32
  }
  func.func @transform_8(%arg0: i32) -> (i32, i32) {
    %c0_i32 = arith.constant 0 : i32
    %c0_i32_0 = arith.constant 0 : i32
    %c0_i32_1 = arith.constant 0 : i32
    return %c0_i32, %c0_i32_0 : i32, i32
  }
  func.func @transform_9(%arg0: i32) -> (i32, i32) {
    %c0_i32 = arith.constant 0 : i32
    %c0_i32_0 = arith.constant 0 : i32
    %c0_i32_1 = arith.constant 0 : i32
    return %c0_i32, %c0_i32_0 : i32, i32
  }
  func.func @transform_10(%arg0: i32) -> (i32, i32) {
    %c0_i32 = arith.constant 0 : i32
    %c0_i32_0 = arith.constant 0 : i32
    %c0_i32_1 = arith.constant 0 : i32
    return %c0_i32, %c0_i32_0 : i32, i32
  }
  func.func @transform_11(%arg0: i32) -> (i32, i32) {
    %c0_i32 = arith.constant 0 : i32
    %c0_i32_0 = arith.constant 0 : i32
    %c0_i32_1 = arith.constant 0 : i32
    return %c0_i32, %c0_i32_0 : i32, i32
  }
  func.func @transform_12(%arg0: i32) -> (i32, i32) {
    %c0_i32 = arith.constant 0 : i32
    %c0_i32_0 = arith.constant 0 : i32
    %c0_i32_1 = arith.constant 0 : i32
    return %c0_i32, %c0_i32_0 : i32, i32
  }
  func.func @transform_13(%arg0: i32) -> (i32, i32) {
    %c0_i32 = arith.constant 0 : i32
    %c0_i32_0 = arith.constant 0 : i32
    %c0_i32_1 = arith.constant 0 : i32
    return %c0_i32, %c0_i32_0 : i32, i32
  }
  func.func @transform_14(%arg0: i32) -> (i32, i32) {
    %c0_i32 = arith.constant 0 : i32
    %c0_i32_0 = arith.constant 0 : i32
    %c0_i32_1 = arith.constant 0 : i32
    return %c0_i32, %c0_i32_0 : i32, i32
  }
  func.func @transform_15(%arg0: i32) -> (i32, i32) {
    %c0_i32 = arith.constant 0 : i32
    %c0_i32_0 = arith.constant 0 : i32
    %c0_i32_1 = arith.constant 0 : i32
    return %c0_i32, %c0_i32_0 : i32, i32
  }
  func.func @transform_16(%arg0: i32) -> (i32, i32) {
    %c0_i32 = arith.constant 0 : i32
    %c0_i32_0 = arith.constant 0 : i32
    %c0_i32_1 = arith.constant 0 : i32
    return %c0_i32, %c0_i32_0 : i32, i32
  }
  func.func @transform_17(%arg0: i32) -> (i32, i32, i32) {
    %c0_i32 = arith.constant 0 : i32
    %c0_i32_0 = arith.constant 0 : i32
    %c0_i32_1 = arith.constant 0 : i32
    return %arg0, %c0_i32, %c0_i32_0 : i32, i32, i32
  }
}

</mosaic_0001>

<llo_original>
// kernel: tpu_custom_call.1
$region0: #{tpu_custom_call.1}
  #allocation0 [shape = 'u32[]', space=smem, size = 0x4, offset = 0x4, fixed_abs, tag = 'smem constant byte address 0x4 - core index']
  #allocation1 [shape = 'u32[144,128]{1,0:T(1,128)}', space=vmem, size = 0x12000, scoped, tag = 'internal scratch']
  #allocation2 [shape = 'bf16[4,8,8]{2,1,0:T(8,128)(2,1)}', space=vmem, size = 0x2000, scoped, tag = 'scratch operand']
  #allocation3 [shape = 'bf16[4,8,8]{2,1,0:T(8,128)(2,1)}', space=vmem, size = 0x2000, scoped, tag = 'scratch operand']
  #allocation4 [shape = 'bf16[4,8,8]{2,1,0:T(8,128)(2,1)}', space=vmem, size = 0x2000, scoped, tag = 'scratch operand']
  #allocation5 [shape = 'bf16[8,32]{1,0:T(8,128)(2,1)}', space=vmem, size = 0x800, scoped, tag = 'scratch operand']
  %s0 = inlined_call_operand.vmem [shape: f32[2,8,32], index: 0, kind: input, shape index: {}]
  %s1 = inlined_call_operand.vmem [shape: bf16[32,32], index: 1, kind: input, shape index: {}]
  %s2 = inlined_call_operand.vmem [shape: bf16[32,32], index: 2, kind: input, shape index: {}]
  %s3 = inlined_call_operand.vmem [shape: bf16[32,32], index: 3, kind: input, shape index: {}]
  %s4 = inlined_call_operand.vmem [shape: f32[1,32], index: 4, kind: input, shape index: {}]
  %s5 = inlined_call_operand.vmem [shape: f32[1,32], index: 5, kind: input, shape index: {}]
  %s6 = inlined_call_operand.vmem [shape: f32[1,32], index: 6, kind: input, shape index: {}]
  %s7 = inlined_call_operand.vmem [shape: bf16[32,32], index: 7, kind: input, shape index: {}]
  %s8 = inlined_call_operand.vmem [shape: f32[1,32], index: 8, kind: input, shape index: {}]
  %s9 = inlined_call_operand.hbm [shape: bf16[32,128], index: 9, kind: input, shape index: {}]
  %s10 = inlined_call_operand.hbm [shape: f32[1,128], index: 10, kind: input, shape index: {}]
  %s11 = inlined_call_operand.vmem [shape: bf16[128,32], index: 11, kind: input, shape index: {}]
  %s12 = inlined_call_operand.vmem [shape: f32[1,32], index: 12, kind: input, shape index: {}]
  %s13 = inlined_call_operand.vmem [shape: f32[1,32], index: 13, kind: input, shape index: {}]
  %s14 = inlined_call_operand.vmem [shape: f32[1,32], index: 14, kind: input, shape index: {}]
  %s15 = inlined_call_operand.vmem [shape: f32[1,32], index: 15, kind: input, shape index: {}]
  %s16 = inlined_call_operand.vmem [shape: f32[1,32], index: 16, kind: input, shape index: {}]
  %s17 = inlined_call_operand.hbm [shape: f32[2,8,32], index: 17, kind: output, shape index: {}]
  %s18 = sld [smem:[#allocation0]]
  $region109: #{tpu_custom_call.1} parent=0
    _
  %s20 = ssub.s32 1, %s18
  %s21 = scalar_select 0, %s20, %s18
  $region1: #{tpu_custom_call.1} parent=0
    #allocation6 [shape = 'u8[8192]{0}', space=vmem, size = 0x2000, scoped, tag = 'input window, operand 9, single buffered']
    #allocation7 [shape = 's32[2]{0}', space=sflag, size = 0x8, scoped, tag = 'scoped memory for tpu_custom_call.1']
    #allocation8 [shape = 's32[2]{0}', space=sflag, size = 0x8, scoped, tag = 'scoped memory for tpu_custom_call.1']
    #allocation9 [shape = 'u8[512]{0}', space=vmem, size = 0x400, scoped, tag = 'input window, operand 10, single buffered']
    #allocation10 [shape = 's32[1]{0}', space=sflag, size = 0x4, scoped, tag = 'scoped memory for tpu_custom_call.1']
    #allocation11 [shape = 'u8[8192]{0}', space=vmem, size = 0x2000, scoped, tag = 'output window, operand 0']
    %22 = vsyncpa [#allocation7], 0
    %23 = vsyncpa [#allocation10], 0
    %24 = vsyncpa [#allocation8], 0
    %s25 = scalar_lea.sflag [#allocation8], 1
    %26 = vsyncpa %s25, 0
    loop: start=0, step=1, limit=4
    $region2: #{tpu_custom_call.1} parent=1 // loop_pre_header
      _
    $region3: #{tpu_custom_call.1} parent=1 // loop_header
      %s28 = sphi 0, %s32
      %p29 = scmp.ge.s32.totalorder %s28, 4
      %s38 = sphi 0, %s40
      %s41 = sphi 0, %s38
      %s42 = sphi 0, %s41
      %s58 = sphi 0, %s42
      %s62 = sphi 0, %s62
      %s64 = sphi 0, %s62
      %s65 = sphi 0, %s64
      %s79 = sphi 0, %s65
      %s83 = sphi 0, %s83
      %s85 = sphi 0, %s83
      %s86 = sphi 0, %s85
      %s100 = sphi 0, %s86
      %s104 = sphi 0, %s104
      %s106 = sphi 0, %s104
      %s107 = sphi 0, %s106
      %s121 = sphi 0, %s107
      %s125 = sphi 0, %s125
      %s127 = sphi 0, %s125
      %s128 = sphi 0, %s127
      %s142 = sphi 0, %s128
      %s146 = sphi 0, %s146
      %s148 = sphi 0, %s146
      %s149 = sphi 0, %s148
      %s163 = sphi 0, %s149
      %s167 = sphi 0, %s167
      %s169 = sphi 0, %s167
      %s170 = sphi 0, %s169
      %s184 = sphi 0, %s170
      %s188 = sphi 0, %s188
      %s190 = sphi 0, %s188
      %s191 = sphi 0, %s190
      %s205 = sphi 0, %s191
      %s209 = sphi 0, %s209
      %s211 = sphi 0, %s209
      %s212 = sphi 0, %s211
      %s226 = sphi 0, %s212
      %s230 = sphi 0, %s230
      %s232 = sphi 0, %s230
      %s233 = sphi 0, %s232
      %s247 = sphi 0, %s233
      %s251 = sphi 0, %s251
      %s253 = sphi 0, %s251
      %s254 = sphi 0, %s253
      %s268 = sphi 0, %s254
      %s272 = sphi 0, %s272
      %s274 = sphi 0, %s272
      %s275 = sphi 0, %s274
      %s289 = sphi 0, %s275
      %s293 = sphi 0, %s293
      %s295 = sphi 0, %s293
      %s296 = sphi 0, %s295
      %s310 = sphi 0, %s296
      %s314 = sphi 0, %s314
      %s316 = sphi 0, %s314
      %s317 = sphi 0, %s316
      %s331 = sphi 0, %s317
      %s335 = sphi 0, %s335
      %s337 = sphi 0, %s335
      %s338 = sphi 0, %s337
      %s352 = sphi 0, %s338
      %s356 = sphi 0, %s356
      %s358 = sphi 0, %s356
      %s359 = sphi 0, %s358
      %s373 = sphi 0, %s359
      %s377 = sphi 0, %s377
      %s379 = sphi 0, %s377
      %s380 = sphi 0, %s379
      %s394 = sphi 0, %s380
      %s400 = sphi 0, %s402
      %s403 = sphi 0, %s400
      %s404 = sphi 0, %s403
      %s420 = sphi 0, %s404
    $region4: #{tpu_custom_call.1} parent=1 // loop_header_branch
      %31 = sbr.rel (%p29) target = $region8
    $region5: #{tpu_custom_call.1} parent=1 // loop_body
      %s33 = ssub.s32 %s28, 1
      %s34 = ssub.s32 %s28, 2
      %s35 = sadd.s32 %s28, 1
      %s36 = ssub.s32 %s28, %s35
      %p37 = scmp.eq.s32.totalorder %s36, 0
      %s39 = sadd.s32 %s38, 1
      %s40 = scalar_select %p37, %s38, %s39
      %p43 = pneg %p37
      %p44 = scmp.eq.s32.totalorder %s28, 1
      %p45 = por %p43, %p44
      %p46 = scmp.ne.s32.totalorder %s38, %s41
      %p47 = scmp.eq.s32.totalorder %s28, 0
      %p48 = por %p46, %p47
      %p49 = scmp.ne.s32.totalorder %s38, %s41
      %p50 = scmp.eq.s32.totalorder %s33, 1
      %p51 = por %p49, %p50
      %p52 = scmp.ne.s32.totalorder %s41, %s42
      %p53 = scmp.eq.s32.totalorder %s33, 0
      %p54 = por %p52, %p53
      %p55 = scmp.ne.s32.totalorder %s41, %s42
      %p56 = scmp.eq.s32.totalorder %s34, 1
      %p57 = por %p55, %p56
      %p59 = scmp.ne.s32.totalorder %s42, %s58
      %p60 = scmp.eq.s32.totalorder %s34, 0
      %p61 = por %p59, %p60
      %s63 = sadd.s32 %s62, 1
      %p66 = scmp.eq.s32.totalorder %s28, 1
      %p67 = scmp.ne.s32.totalorder %s62, %s64
      %p68 = scmp.eq.s32.totalorder %s28, 0
      %p69 = por %p67, %p68
      %p70 = scmp.ne.s32.totalorder %s62, %s64
      %p71 = scmp.eq.s32.totalorder %s33, 1
      %p72 = por %p70, %p71
      %p73 = scmp.ne.s32.totalorder %s64, %s65
      %p74 = scmp.eq.s32.totalorder %s33, 0
      %p75 = por %p73, %p74
      %p76 = scmp.ne.s32.totalorder %s64, %s65
      %p77 = scmp.eq.s32.totalorder %s34, 1
      %p78 = por %p76, %p77
      %p80 = scmp.ne.s32.totalorder %s65, %s79
      %p81 = scmp.eq.s32.totalorder %s34, 0
      %p82 = por %p80, %p81
      %s84 = sadd.s32 %s83, 1
      %p87 = scmp.eq.s32.totalorder %s28, 1
      %p88 = scmp.ne.s32.totalorder %s83, %s85
      %p89 = scmp.eq.s32.totalorder %s28, 0
      %p90 = por %p88, %p89
      %p91 = scmp.ne.s32.totalorder %s83, %s85
      %p92 = scmp.eq.s32.totalorder %s33, 1
      %p93 = por %p91, %p92
      %p94 = scmp.ne.s32.totalorder %s85, %s86
      %p95 = scmp.eq.s32.totalorder %s33, 0
      %p96 = por %p94, %p95
      %p97 = scmp.ne.s32.totalorder %s85, %s86
      %p98 = scmp.eq.s32.totalorder %s34, 1
      %p99 = por %p97, %p98
      %p101 = scmp.ne.s32.totalorder %s86, %s100
      %p102 = scmp.eq.s32.totalorder %s34, 0
      %p103 = por %p101, %p102
      %s105 = sadd.s32 %s104, 1
      %p108 = scmp.eq.s32.totalorder %s28, 1
      %p109 = scmp.ne.s32.totalorder %s104, %s106
      %p110 = scmp.eq.s32.totalorder %s28, 0
      %p111 = por %p109, %p110
      %p112 = scmp.ne.s32.totalorder %s104, %s106
      %p113 = scmp.eq.s32.totalorder %s33, 1
      %p114 = por %p112, %p113
      %p115 = scmp.ne.s32.totalorder %s106, %s107
      %p116 = scmp.eq.s32.totalorder %s33, 0
      %p117 = por %p115, %p116
      %p118 = scmp.ne.s32.totalorder %s106, %s107
      %p119 = scmp.eq.s32.totalorder %s34, 1
      %p120 = por %p118, %p119
      %p122 = scmp.ne.s32.totalorder %s107, %s121
      %p123 = scmp.eq.s32.totalorder %s34, 0
      %p124 = por %p122, %p123
      %s126 = sadd.s32 %s125, 1
      %p129 = scmp.eq.s32.totalorder %s28, 1
      %p130 = scmp.ne.s32.totalorder %s125, %s127
      %p131 = scmp.eq.s32.totalorder %s28, 0
      %p132 = por %p130, %p131
      %p133 = scmp.ne.s32.totalorder %s125, %s127
      %p134 = scmp.eq.s32.totalorder %s33, 1
      %p135 = por %p133, %p134
      %p136 = scmp.ne.s32.totalorder %s127, %s128
      %p137 = scmp.eq.s32.totalorder %s33, 0
      %p138 = por %p136, %p137
      %p139 = scmp.ne.s32.totalorder %s127, %s128
      %p140 = scmp.eq.s32.totalorder %s34, 1
      %p141 = por %p139, %p140
      %p143 = scmp.ne.s32.totalorder %s128, %s142
      %p144 = scmp.eq.s32.totalorder %s34, 0
      %p145 = por %p143, %p144
      %s147 = sadd.s32 %s146, 1
      %p150 = scmp.eq.s32.totalorder %s28, 1
      %p151 = scmp.ne.s32.totalorder %s146, %s148
      %p152 = scmp.eq.s32.totalorder %s28, 0
      %p153 = por %p151, %p152
      %p154 = scmp.ne.s32.totalorder %s146, %s148
      %p155 = scmp.eq.s32.totalorder %s33, 1
      %p156 = por %p154, %p155
      %p157 = scmp.ne.s32.totalorder %s148, %s149
      %p158 = scmp.eq.s32.totalorder %s33, 0
      %p159 = por %p157, %p158
      %p160 = scmp.ne.s32.totalorder %s148, %s149
      %p161 = scmp.eq.s32.totalorder %s34, 1
      %p162 = por %p160, %p161
      %p164 = scmp.ne.s32.totalorder %s149, %s163
      %p165 = scmp.eq.s32.totalorder %s34, 0
      %p166 = por %p164, %p165
      %s168 = sadd.s32 %s167, 1
      %p171 = scmp.eq.s32.totalorder %s28, 1
      %p172 = scmp.ne.s32.totalorder %s167, %s169
      %p173 = scmp.eq.s32.totalorder %s28, 0
      %p174 = por %p172, %p173
      %p175 = scmp.ne.s32.totalorder %s167, %s169
      %p176 = scmp.eq.s32.totalorder %s33, 1
      %p177 = por %p175, %p176
      %p178 = scmp.ne.s32.totalorder %s169, %s170
      %p179 = scmp.eq.s32.totalorder %s33, 0
      %p180 = por %p178, %p179
      %p181 = scmp.ne.s32.totalorder %s169, %s170
      %p182 = scmp.eq.s32.totalorder %s34, 1
      %p183 = por %p181, %p182
      %p185 = scmp.ne.s32.totalorder %s170, %s184
      %p186 = scmp.eq.s32.totalorder %s34, 0
      %p187 = por %p185, %p186
      %s189 = sadd.s32 %s188, 1
      %p192 = scmp.eq.s32.totalorder %s28, 1
      %p193 = scmp.ne.s32.totalorder %s188, %s190
      %p194 = scmp.eq.s32.totalorder %s28, 0
      %p195 = por %p193, %p194
      %p196 = scmp.ne.s32.totalorder %s188, %s190
      %p197 = scmp.eq.s32.totalorder %s33, 1
      %p198 = por %p196, %p197
      %p199 = scmp.ne.s32.totalorder %s190, %s191
      %p200 = scmp.eq.s32.totalorder %s33, 0
      %p201 = por %p199, %p200
      %p202 = scmp.ne.s32.totalorder %s190, %s191
      %p203 = scmp.eq.s32.totalorder %s34, 1
      %p204 = por %p202, %p203
      %p206 = scmp.ne.s32.totalorder %s191, %s205
      %p207 = scmp.eq.s32.totalorder %s34, 0
      %p208 = por %p206, %p207
      %s210 = sadd.s32 %s209, 1
      %p213 = scmp.eq.s32.totalorder %s28, 1
      %p214 = scmp.ne.s32.totalorder %s209, %s211
      %p215 = scmp.eq.s32.totalorder %s28, 0
      %p216 = por %p214, %p215
      %p217 = scmp.ne.s32.totalorder %s209, %s211
      %p218 = scmp.eq.s32.totalorder %s33, 1
      %p219 = por %p217, %p218
      %p220 = scmp.ne.s32.totalorder %s211, %s212
      %p221 = scmp.eq.s32.totalorder %s33, 0
      %p222 = por %p220, %p221
      %p223 = scmp.ne.s32.totalorder %s211, %s212
      %p224 = scmp.eq.s32.totalorder %s34, 1
      %p225 = por %p223, %p224
      %p227 = scmp.ne.s32.totalorder %s212, %s226
      %p228 = scmp.eq.s32.totalorder %s34, 0
      %p229 = por %p227, %p228
      %s231 = sadd.s32 %s230, 1
      %p234 = scmp.eq.s32.totalorder %s28, 1
      %p235 = scmp.ne.s32.totalorder %s230, %s232
      %p236 = scmp.eq.s32.totalorder %s28, 0
      %p237 = por %p235, %p236
      %p238 = scmp.ne.s32.totalorder %s230, %s232
      %p239 = scmp.eq.s32.totalorder %s33, 1
      %p240 = por %p238, %p239
      %p241 = scmp.ne.s32.totalorder %s232, %s233
      %p242 = scmp.eq.s32.totalorder %s33, 0
      %p243 = por %p241, %p242
      %p244 = scmp.ne.s32.totalorder %s232, %s233
      %p245 = scmp.eq.s32.totalorder %s34, 1
      %p246 = por %p244, %p245
      %p248 = scmp.ne.s32.totalorder %s233, %s247
      %p249 = scmp.eq.s32.totalorder %s34, 0
      %p250 = por %p248, %p249
      %s252 = sadd.s32 %s251, 1
      %p255 = scmp.eq.s32.totalorder %s28, 1
      %p256 = scmp.ne.s32.totalorder %s251, %s253
      %p257 = scmp.eq.s32.totalorder %s28, 0
      %p258 = por %p256, %p257
      %p259 = scmp.ne.s32.totalorder %s251, %s253
      %p260 = scmp.eq.s32.totalorder %s33, 1
      %p261 = por %p259, %p260
      %p262 = scmp.ne.s32.totalorder %s253, %s254
      %p263 = scmp.eq.s32.totalorder %s33, 0
      %p264 = por %p262, %p263
      %p265 = scmp.ne.s32.totalorder %s253, %s254
      %p266 = scmp.eq.s32.totalorder %s34, 1
      %p267 = por %p265, %p266
      %p269 = scmp.ne.s32.totalorder %s254, %s268
      %p270 = scmp.eq.s32.totalorder %s34, 0
      %p271 = por %p269, %p270
      %s273 = sadd.s32 %s272, 1
      %p276 = scmp.eq.s32.totalorder %s28, 1
      %p277 = scmp.ne.s32.totalorder %s272, %s274
      %p278 = scmp.eq.s32.totalorder %s28, 0
      %p279 = por %p277, %p278
      %p280 = scmp.ne.s32.totalorder %s272, %s274
      %p281 = scmp.eq.s32.totalorder %s33, 1
      %p282 = por %p280, %p281
      %p283 = scmp.ne.s32.totalorder %s274, %s275
      %p284 = scmp.eq.s32.totalorder %s33, 0
      %p285 = por %p283, %p284
      %p286 = scmp.ne.s32.totalorder %s274, %s275
      %p287 = scmp.eq.s32.totalorder %s34, 1
      %p288 = por %p286, %p287
      %p290 = scmp.ne.s32.totalorder %s275, %s289
      %p291 = scmp.eq.s32.totalorder %s34, 0
      %p292 = por %p290, %p291
      %s294 = sadd.s32 %s293, 1
      %p297 = scmp.eq.s32.totalorder %s28, 1
      %p298 = scmp.ne.s32.totalorder %s293, %s295
      %p299 = scmp.eq.s32.totalorder %s28, 0
      %p300 = por %p298, %p299
      %p301 = scmp.ne.s32.totalorder %s293, %s295
      %p302 = scmp.eq.s32.totalorder %s33, 1
      %p303 = por %p301, %p302
      %p304 = scmp.ne.s32.totalorder %s295, %s296
      %p305 = scmp.eq.s32.totalorder %s33, 0
      %p306 = por %p304, %p305
      %p307 = scmp.ne.s32.totalorder %s295, %s296
      %p308 = scmp.eq.s32.totalorder %s34, 1
      %p309 = por %p307, %p308
      %p311 = scmp.ne.s32.totalorder %s296, %s310
      %p312 = scmp.eq.s32.totalorder %s34, 0
      %p313 = por %p311, %p312
      %s315 = sadd.s32 %s314, 1
      %p318 = scmp.eq.s32.totalorder %s28, 1
      %p319 = scmp.ne.s32.totalorder %s314, %s316
      %p320 = scmp.eq.s32.totalorder %s28, 0
      %p321 = por %p319, %p320
      %p322 = scmp.ne.s32.totalorder %s314, %s316
      %p323 = scmp.eq.s32.totalorder %s33, 1
      %p324 = por %p322, %p323
      %p325 = scmp.ne.s32.totalorder %s316, %s317
      %p326 = scmp.eq.s32.totalorder %s33, 0
      %p327 = por %p325, %p326
      %p328 = scmp.ne.s32.totalorder %s316, %s317
      %p329 = scmp.eq.s32.totalorder %s34, 1
      %p330 = por %p328, %p329
      %p332 = scmp.ne.s32.totalorder %s317, %s331
      %p333 = scmp.eq.s32.totalorder %s34, 0
      %p334 = por %p332, %p333
      %s336 = sadd.s32 %s335, 1
      %p339 = scmp.eq.s32.totalorder %s28, 1
      %p340 = scmp.ne.s32.totalorder %s335, %s337
      %p341 = scmp.eq.s32.totalorder %s28, 0
      %p342 = por %p340, %p341
      %p343 = scmp.ne.s32.totalorder %s335, %s337
      %p344 = scmp.eq.s32.totalorder %s33, 1
      %p345 = por %p343, %p344
      %p346 = scmp.ne.s32.totalorder %s337, %s338
      %p347 = scmp.eq.s32.totalorder %s33, 0
      %p348 = por %p346, %p347
      %p349 = scmp.ne.s32.totalorder %s337, %s338
      %p350 = scmp.eq.s32.totalorder %s34, 1
      %p351 = por %p349, %p350
      %p353 = scmp.ne.s32.totalorder %s338, %s352
      %p354 = scmp.eq.s32.totalorder %s34, 0
      %p355 = por %p353, %p354
      %s357 = sadd.s32 %s356, 1
      %p360 = scmp.eq.s32.totalorder %s28, 1
      %p361 = scmp.ne.s32.totalorder %s356, %s358
      %p362 = scmp.eq.s32.totalorder %s28, 0
      %p363 = por %p361, %p362
      %p364 = scmp.ne.s32.totalorder %s356, %s358
      %p365 = scmp.eq.s32.totalorder %s33, 1
      %p366 = por %p364, %p365
      %p367 = scmp.ne.s32.totalorder %s358, %s359
      %p368 = scmp.eq.s32.totalorder %s33, 0
      %p369 = por %p367, %p368
      %p370 = scmp.ne.s32.totalorder %s358, %s359
      %p371 = scmp.eq.s32.totalorder %s34, 1
      %p372 = por %p370, %p371
      %p374 = scmp.ne.s32.totalorder %s359, %s373
      %p375 = scmp.eq.s32.totalorder %s34, 0
      %p376 = por %p374, %p375
      %s378 = sadd.s32 %s377, 1
      %p381 = scmp.eq.s32.totalorder %s28, 1
      %p382 = scmp.ne.s32.totalorder %s377, %s379
      %p383 = scmp.eq.s32.totalorder %s28, 0
      %p384 = por %p382, %p383
      %p385 = scmp.ne.s32.totalorder %s377, %s379
      %p386 = scmp.eq.s32.totalorder %s33, 1
      %p387 = por %p385, %p386
      %p388 = scmp.ne.s32.totalorder %s379, %s380
      %p389 = scmp.eq.s32.totalorder %s33, 0
      %p390 = por %p388, %p389
      %p391 = scmp.ne.s32.totalorder %s379, %s380
      %p392 = scmp.eq.s32.totalorder %s34, 1
      %p393 = por %p391, %p392
      %p395 = scmp.ne.s32.totalorder %s380, %s394
      %p396 = scmp.eq.s32.totalorder %s34, 0
      %p397 = por %p395, %p396
      %s398 = ssub.s32 %s28, %s35
      %p399 = scmp.eq.s32.totalorder %s398, 0
      %s401 = sadd.s32 %s400, 1
      %s402 = scalar_select %p399, %s400, %s401
      %p405 = pneg %p399
      %p406 = scmp.eq.s32.totalorder %s28, 1
      %p407 = por %p405, %p406
      %p408 = scmp.ne.s32.totalorder %s400, %s403
      %p409 = scmp.eq.s32.totalorder %s28, 0
      %p410 = por %p408, %p409
      %p411 = scmp.ne.s32.totalorder %s400, %s403
      %p412 = scmp.eq.s32.totalorder %s33, 1
      %p413 = por %p411, %p412
      %p414 = scmp.ne.s32.totalorder %s403, %s404
      %p415 = scmp.eq.s32.totalorder %s33, 0
      %p416 = por %p414, %p415
      %p417 = scmp.ne.s32.totalorder %s403, %s404
      %p418 = scmp.eq.s32.totalorder %s34, 1
      %p419 = por %p417, %p418
      %p421 = scmp.ne.s32.totalorder %s404, %s420
      %p422 = scmp.eq.s32.totalorder %s34, 0
      %p423 = por %p421, %p422
      %p424 = scmp.le.s32.totalorder 1, %s28
      %p425 = scmp.lt.s32.totalorder %s28, 3
      %p426 = pnand %p424, %p425
      %p427 = pneg %p426
      // Predicated region
      $region9: #{tpu_custom_call.1} parent=5 // pred_check
        _
      $region10: #{tpu_custom_call.1} parent=5 // pred_check_branch
        %429 = sbr.rel (%p426) target = $region12
      $region11: #{tpu_custom_call.1} parent=5 // pred_region
        %s430 = ssub.s32 %s28, 1
        // Predicated region
        $region13: #{tpu_custom_call.1} parent=11 // pred_check
          %p431 = pneg %p75
        $region14: #{tpu_custom_call.1} parent=11 // pred_check_branch
          %433 = sbr.rel (%p431) target = $region16
        $region15: #{tpu_custom_call.1} parent=11 // pred_region
          _
        $region16: #{tpu_custom_call.1} parent=11 // pred_fallthru
          _
        // Predicated region
        $region17: #{tpu_custom_call.1} parent=11 // pred_check
          %p434 = pneg %p96
        $region18: #{tpu_custom_call.1} parent=11 // pred_check_branch
          %436 = sbr.rel (%p434) target = $region20
        $region19: #{tpu_custom_call.1} parent=11 // pred_region
          _
        $region20: #{tpu_custom_call.1} parent=11 // pred_fallthru
          _
        // Predicated region
        $region21: #{tpu_custom_call.1} parent=11 // pred_check
          %p437 = pneg %p117
        $region22: #{tpu_custom_call.1} parent=11 // pred_check_branch
          %439 = sbr.rel (%p437) target = $region24
        $region23: #{tpu_custom_call.1} parent=11 // pred_region
          _
        $region24: #{tpu_custom_call.1} parent=11 // pred_fallthru
          _
        // Predicated region
        $region25: #{tpu_custom_call.1} parent=11 // pred_check
          %p440 = pneg %p138
        $region26: #{tpu_custom_call.1} parent=11 // pred_check_branch
          %442 = sbr.rel (%p440) target = $region28
        $region27: #{tpu_custom_call.1} parent=11 // pred_region
          _
        $region28: #{tpu_custom_call.1} parent=11 // pred_fallthru
          _
        // Predicated region
        $region29: #{tpu_custom_call.1} parent=11 // pred_check
          %p443 = pneg %p159
        $region30: #{tpu_custom_call.1} parent=11 // pred_check_branch
          %445 = sbr.rel (%p443) target = $region32
        $region31: #{tpu_custom_call.1} parent=11 // pred_region
          _
        $region32: #{tpu_custom_call.1} parent=11 // pred_fallthru
          _
        // Predicated region
        $region33: #{tpu_custom_call.1} parent=11 // pred_check
          %p446 = pneg %p180
        $region34: #{tpu_custom_call.1} parent=11 // pred_check_branch
          %448 = sbr.rel (%p446) target = $region36
        $region35: #{tpu_custom_call.1} parent=11 // pred_region
          _
        $region36: #{tpu_custom_call.1} parent=11 // pred_fallthru
          _
        // Predicated region
        $region37: #{tpu_custom_call.1} parent=11 // pred_check
          %p449 = pneg %p201
        $region38: #{tpu_custom_call.1} parent=11 // pred_check_branch
          %451 = sbr.rel (%p449) target = $region40
        $region39: #{tpu_custom_call.1} parent=11 // pred_region
          _
        $region40: #{tpu_custom_call.1} parent=11 // pred_fallthru
          _
        // Predicated region
        $region41: #{tpu_custom_call.1} parent=11 // pred_check
          %p452 = pneg %p222
        $region42: #{tpu_custom_call.1} parent=11 // pred_check_branch
          %454 = sbr.rel (%p452) target = $region44
        $region43: #{tpu_custom_call.1} parent=11 // pred_region
          _
        $region44: #{tpu_custom_call.1} parent=11 // pred_fallthru
          _
        // Predicated region
        $region45: #{tpu_custom_call.1} parent=11 // pred_check
          %p455 = pneg %p243
        $region46: #{tpu_custom_call.1} parent=11 // pred_check_branch
          %457 = sbr.rel (%p455) target = $region48
        $region47: #{tpu_custom_call.1} parent=11 // pred_region
          %s459 = ssub.s32 256, 256
          %460 = vsyncadd [#allocation7], %s459
          %s461 = sshll.u32 [#allocation6], 4
          %s462 = int_to_ptr.vmem [resolvable:$true] %s461
          %467 = dma.hbm_to_vmem [thread:$0]  %s9, 256, %s462, [#allocation7], 64, 64, 4
        $region48: #{tpu_custom_call.1} parent=11 // pred_fallthru
          _
        // Predicated region
        $region49: #{tpu_custom_call.1} parent=11 // pred_check
          %p468 = pneg %p264
        $region50: #{tpu_custom_call.1} parent=11 // pred_check_branch
          %470 = sbr.rel (%p468) target = $region52
        $region51: #{tpu_custom_call.1} parent=11 // pred_region
          %s472 = ssub.s32 16, 16
          %473 = vsyncadd [#allocation10], %s472
          %s475 = sshll.u32 [#allocation9], 4
          %s476 = int_to_ptr.vmem [resolvable:$true] %s475
          %478 = dma.hbm_to_vmem [thread:$0]  %s10, 16, %s476, [#allocation10]
        $region52: #{tpu_custom_call.1} parent=11 // pred_fallthru
          _
        // Predicated region
        $region53: #{tpu_custom_call.1} parent=11 // pred_check
          %p479 = pneg %p285
        $region54: #{tpu_custom_call.1} parent=11 // pred_check_branch
          %481 = sbr.rel (%p479) target = $region56
        $region55: #{tpu_custom_call.1} parent=11 // pred_region
          _
        $region56: #{tpu_custom_call.1} parent=11 // pred_fallthru
          _
        // Predicated region
        $region57: #{tpu_custom_call.1} parent=11 // pred_check
          %p482 = pneg %p306
        $region58: #{tpu_custom_call.1} parent=11 // pred_check_branch
          %484 = sbr.rel (%p482) target = $region60
        $region59: #{tpu_custom_call.1} parent=11 // pred_region
          _
        $region60: #{tpu_custom_call.1} parent=11 // pred_fallthru
          _
        // Predicated region
        $region61: #{tpu_custom_call.1} parent=11 // pred_check
          %p485 = pneg %p327
        $region62: #{tpu_custom_call.1} parent=11 // pred_check_branch
          %487 = sbr.rel (%p485) target = $region64
        $region63: #{tpu_custom_call.1} parent=11 // pred_region
          _
        $region64: #{tpu_custom_call.1} parent=11 // pred_fallthru
          _
        // Predicated region
        $region65: #{tpu_custom_call.1} parent=11 // pred_check
          %p488 = pneg %p348
        $region66: #{tpu_custom_call.1} parent=11 // pred_check_branch
          %490 = sbr.rel (%p488) target = $region68
        $region67: #{tpu_custom_call.1} parent=11 // pred_region
          _
        $region68: #{tpu_custom_call.1} parent=11 // pred_fallthru
          _
        // Predicated region
        $region69: #{tpu_custom_call.1} parent=11 // pred_check
          %p491 = pneg %p369
        $region70: #{tpu_custom_call.1} parent=11 // pred_check_branch
          %493 = sbr.rel (%p491) target = $region72
        $region71: #{tpu_custom_call.1} parent=11 // pred_region
          _
        $region72: #{tpu_custom_call.1} parent=11 // pred_fallthru
          _
        // Predicated region
        $region73: #{tpu_custom_call.1} parent=11 // pred_check
          %p494 = pneg %p390
        $region74: #{tpu_custom_call.1} parent=11 // pred_check_branch
          %496 = sbr.rel (%p494) target = $region76
        $region75: #{tpu_custom_call.1} parent=11 // pred_region
          _
        $region76: #{tpu_custom_call.1} parent=11 // pred_fallthru
          _
      $region12: #{tpu_custom_call.1} parent=5 // pred_fallthru
        _
      %p497 = scmp.lt.s32.totalorder %s28, 2
      // Predicated region
      $region77: #{tpu_custom_call.1} parent=5 // pred_check
        %p498 = pneg %p497
      $region78: #{tpu_custom_call.1} parent=5 // pred_check_branch
        %500 = sbr.rel (%p498) target = $region80
      $region79: #{tpu_custom_call.1} parent=5 // pred_region
        // Predicated region
        $region81: #{tpu_custom_call.1} parent=79 // pred_check
          %p501 = pneg %p48
        $region82: #{tpu_custom_call.1} parent=79 // pred_check_branch
          %503 = sbr.rel (%p501) target = $region84
        $region83: #{tpu_custom_call.1} parent=79 // pred_region
          %p504 = scmp.lt.s32.totalorder %s28, 1
          %s505 = scalar_select %p504, %s28, 1
          %s506 = smul.addr %s505, 8
          %s507 = scalar_lea.vmem %s0, %s506
        $region84: #{tpu_custom_call.1} parent=79 // pred_fallthru
          _
      $region80: #{tpu_custom_call.1} parent=5 // pred_fallthru
        _
      %p508 = scmp.le.s32.totalorder 1, %s28
      %p509 = scmp.lt.s32.totalorder %s28, 3
      %p510 = pnand %p508, %p509
      %p511 = pneg %p510
      // Predicated region
      $region85: #{tpu_custom_call.1} parent=5 // pred_check
        _
      $region86: #{tpu_custom_call.1} parent=5 // pred_check_branch
        %513 = sbr.rel (%p510) target = $region88
      $region87: #{tpu_custom_call.1} parent=5 // pred_region
        %s514 = ssub.s32 %s28, 1
        // Predicated region
        $region89: #{tpu_custom_call.1} parent=87 // pred_check
          %p515 = pneg %p243
        $region90: #{tpu_custom_call.1} parent=87 // pred_check_branch
          %517 = sbr.rel (%p515) target = $region92
        $region91: #{tpu_custom_call.1} parent=87 // pred_region
          %518 = dma.done [#allocation7], 256
        $region92: #{tpu_custom_call.1} parent=87 // pred_fallthru
          _
        // Predicated region
        $region93: #{tpu_custom_call.1} parent=87 // pred_check
          %p519 = pneg %p264
        $region94: #{tpu_custom_call.1} parent=87 // pred_check_branch
          %521 = sbr.rel (%p519) target = $region96
        $region95: #{tpu_custom_call.1} parent=87 // pred_region
          %522 = dma.done [#allocation10], 16
        $region96: #{tpu_custom_call.1} parent=87 // pred_fallthru
          _
        %p523 = scmp.lt.s32.totalorder %s33, 1
        %s524 = scalar_select %p523, %s33, 1
        %s525 = smul.addr %s524, 8
        %s526 = scalar_lea.vmem %s0, %s525
        %p527 = pneg %p54
        %p528 = pneg %p51
        %p529 = pneg %p75
        %p530 = pneg %p72
        %p531 = pneg %p96
        %p532 = pneg %p93
        %p533 = pneg %p117
        %p534 = pneg %p114
        %p535 = pneg %p138
        %p536 = pneg %p135
        %p537 = pneg %p159
        %p538 = pneg %p156
        %p539 = pneg %p180
        %p540 = pneg %p177
        %p541 = pneg %p201
        %p542 = pneg %p198
        %p543 = pneg %p222
        %p544 = pneg %p219
        %p545 = pneg %p243
        %p546 = pneg %p240
        %p547 = pneg %p264
        %p548 = pneg %p261
        %p549 = pneg %p285
        %p550 = pneg %p282
        %p551 = pneg %p306
        %p552 = pneg %p303
        %p553 = pneg %p327
        %p554 = pneg %p324
        %p555 = pneg %p348
        %p556 = pneg %p345
        %p557 = pneg %p369
        %p558 = pneg %p366
        %p559 = pneg %p390
        %p560 = pneg %p387
        %p561 = pneg %p416
        %p562 = pneg %p413
        %s563 = sand.u32 %s403, 1
        %s564 = scalar_lea.sflag [#allocation8], %s563
        %s565 = sand.u32 %s403, 1
        %s566 = smul.addr %s565, 8
        %s567 = scalar_lea.vmem [#allocation11], %s566
        %p568 = scmp.lt.s32.totalorder %s33, 1
        %s569 = scalar_select %p568, %s33, 1
        %s570 = smul.addr %s569, 8
        %s571 = scalar_lea.vmem %s0, %s570
        %v573 = vld [vmem:[%s571] sm:$0xff]
        %v574 = vpack.c.bf16 %v573, %v573
        %v575 = vld [vmem:[%s1] sm:$0xf]
        %v576 = vld [vmem:[%s1 + $0x4] sm:$0xf]
        %v577 = vld [vmem:[%s1 + $0x8] sm:$0xf]
        %v578 = vld [vmem:[%s1 + $0xc] sm:$0xf]
        %v579 = vld [vmem:[%s4] sm:$0x1]
        %v581 = vlaneseq
        %v582 = vshrl.u32 %v581, 7
        %v583 = vsub.s32 0, %v582
        %v584 = vrot.slane %v579, %v583
        %v590 = vunpack.c.l.b16 %v575
        %v591 = vunpack.c.l.b16 %v576
        %v592 = vunpack.c.l.b16 %v577
        %v593 = vunpack.c.l.b16 %v578
        %v594 = vpack.c.b16 %v591, %v590
        %v595 = vpack.c.b16 %v593, %v592
        %vm598 = vcmask 261120
        %v600 = vsel %vm598, %v574, 0
        %602 = vmatprep.subr.bf16.mxu0 0
        %603 = vmatpush1.bf16.msra.mxu0 0
        %604 = vmatprep.subr.bf16.mxu0 0
        %605 = vmatpush1.bf16.msra.mxu0 0
        %606 = vmatprep.subr.bf16.mxu0 0
        %607 = vmatpush1.bf16.msra.mxu0 0
        %608 = vmatprep.subr.bf16.mxu0 0
        %609 = vmatpush1.bf16.msra.mxu0 0
        %610 = vmatprep.subr.bf16.mxu0 0
        %611 = vmatpush1.bf16.msra.mxu0 0
        %612 = vmatprep.subr.bf16.mxu0 0
        %613 = vmatpush1.bf16.msra.mxu0 0
        %614 = vmatprep.subr.bf16.mxu0 0
        %615 = vmatpush1.bf16.msra.mxu0 %v595
        %616 = vmatprep.subr.bf16.mxu0 0
        %617 = vmatpush1.bf16.msra.mxu0 %v594
        %618 = vmatprep.subr.bf16.mxu0 0
        %619 = vmatpush2.bf16.msra.mxu0 0
        %620 = vmatprep.subr.bf16.mxu0 0
        %621 = vmatpush2.bf16.msra.mxu0 0
        %622 = vmatprep.subr.bf16.mxu0 0
        %623 = vmatpush2.bf16.msra.mxu0 0
        %624 = vmatprep.subr.bf16.mxu0 0
        %625 = vmatpush2.bf16.msra.mxu0 0
        %626 = vmatprep.subr.bf16.mxu0 0
        %627 = vmatpush2.bf16.msra.mxu0 0
        %628 = vmatprep.subr.bf16.mxu0 0
        %629 = vmatpush2.bf16.msra.mxu0 0
        %630 = vmatprep.subr.bf16.mxu0 0
        %631 = vmatpush2.bf16.msra.mxu0 0
        %632 = vmatprep.subr.bf16.mxu0 0
        %633 = vmatpush2.bf16.msra.mxu0 0
        %634 = vmatprep.mubr.bf16.mxu0 0
        %635 = vmatmul.mubr.bf16.gmra.mxu0 %v600
        %v636 = vpop.f32.mrf.mxu0
        %v637 = vadd.f32 %v584, %v636
        %v638 = vpop.f32.mrf.mxu0
        %v639 = vpop.f32.mrf.mxu0
        %v640 = vpop.f32.mrf.mxu0
        %641 = vdwg.mxu0
        %v642 = vld [vmem:[%s2] sm:$0xf]
        %v643 = vld [vmem:[%s2 + $0x4] sm:$0xf]
        %v644 = vld [vmem:[%s2 + $0x8] sm:$0xf]
        %v645 = vld [vmem:[%s2 + $0xc] sm:$0xf]
        %v646 = vld [vmem:[%s5] sm:$0x1]
        %v648 = vlaneseq
        %v649 = vshrl.u32 %v648, 7
        %v650 = vsub.s32 0, %v649
        %v651 = vrot.slane %v646, %v650
        %v657 = vunpack.c.l.b16 %v642
        %v658 = vunpack.c.l.b16 %v643
        %v659 = vunpack.c.l.b16 %v644
        %v660 = vunpack.c.l.b16 %v645
        %v661 = vpack.c.b16 %v658, %v657
        %v662 = vpack.c.b16 %v660, %v659
        %665 = vmatprep.subr.bf16.mxu0 0
        %666 = vmatpush1.bf16.msra.mxu0 0
        %667 = vmatprep.subr.bf16.mxu0 0
        %668 = vmatpush1.bf16.msra.mxu0 0
        %669 = vmatprep.subr.bf16.mxu0 0
        %670 = vmatpush1.bf16.msra.mxu0 0
        %671 = vmatprep.subr.bf16.mxu0 0
        %672 = vmatpush1.bf16.msra.mxu0 0
        %673 = vmatprep.subr.bf16.mxu0 0
        %674 = vmatpush1.bf16.msra.mxu0 0
        %675 = vmatprep.subr.bf16.mxu0 0
        %676 = vmatpush1.bf16.msra.mxu0 0
        %677 = vmatprep.subr.bf16.mxu0 0
        %678 = vmatpush1.bf16.msra.mxu0 %v662
        %679 = vmatprep.subr.bf16.mxu0 0
        %680 = vmatpush1.bf16.msra.mxu0 %v661
        %681 = vmatprep.subr.bf16.mxu0 0
        %682 = vmatpush2.bf16.msra.mxu0 0
        %683 = vmatprep.subr.bf16.mxu0 0
        %684 = vmatpush2.bf16.msra.mxu0 0
        %685 = vmatprep.subr.bf16.mxu0 0
        %686 = vmatpush2.bf16.msra.mxu0 0
        %687 = vmatprep.subr.bf16.mxu0 0
        %688 = vmatpush2.bf16.msra.mxu0 0
        %689 = vmatprep.subr.bf16.mxu0 0
        %690 = vmatpush2.bf16.msra.mxu0 0
        %691 = vmatprep.subr.bf16.mxu0 0
        %692 = vmatpush2.bf16.msra.mxu0 0
        %693 = vmatprep.subr.bf16.mxu0 0
        %694 = vmatpush2.bf16.msra.mxu0 0
        %695 = vmatprep.subr.bf16.mxu0 0
        %696 = vmatpush2.bf16.msra.mxu0 0
        %697 = vmatprep.mubr.bf16.mxu0 0
        %698 = vmatmul.mubr.bf16.gmra.mxu0 %v600
        %v699 = vpop.f32.mrf.mxu0
        %v700 = vadd.f32 %v651, %v699
        %v701 = vpop.f32.mrf.mxu0
        %v702 = vpop.f32.mrf.mxu0
        %v703 = vpop.f32.mrf.mxu0
        %704 = vdwg.mxu0
        %v705 = vld [vmem:[%s3] sm:$0xf]
        %v706 = vld [vmem:[%s3 + $0x4] sm:$0xf]
        %v707 = vld [vmem:[%s3 + $0x8] sm:$0xf]
        %v708 = vld [vmem:[%s3 + $0xc] sm:$0xf]
        %v709 = vld [vmem:[%s6] sm:$0x1]
        %v711 = vlaneseq
        %v712 = vshrl.u32 %v711, 7
        %v713 = vsub.s32 0, %v712
        %v714 = vrot.slane %v709, %v713
        %v720 = vunpack.c.l.b16 %v705
        %v721 = vunpack.c.l.b16 %v706
        %v722 = vunpack.c.l.b16 %v707
        %v723 = vunpack.c.l.b16 %v708
        %v724 = vpack.c.b16 %v721, %v720
        %v725 = vpack.c.b16 %v723, %v722
        %728 = vmatprep.subr.bf16.mxu0 0
        %729 = vmatpush1.bf16.msra.mxu0 0
        %730 = vmatprep.subr.bf16.mxu0 0
        %731 = vmatpush1.bf16.msra.mxu0 0
        %732 = vmatprep.subr.bf16.mxu0 0
        %733 = vmatpush1.bf16.msra.mxu0 0
        %734 = vmatprep.subr.bf16.mxu0 0
        %735 = vmatpush1.bf16.msra.mxu0 0
        %736 = vmatprep.subr.bf16.mxu0 0
        %737 = vmatpush1.bf16.msra.mxu0 0
        %738 = vmatprep.subr.bf16.mxu0 0
        %739 = vmatpush1.bf16.msra.mxu0 0
        %740 = vmatprep.subr.bf16.mxu0 0
        %741 = vmatpush1.bf16.msra.mxu0 %v725
        %742 = vmatprep.subr.bf16.mxu0 0
        %743 = vmatpush1.bf16.msra.mxu0 %v724
        %744 = vmatprep.subr.bf16.mxu0 0
        %745 = vmatpush2.bf16.msra.mxu0 0
        %746 = vmatprep.subr.bf16.mxu0 0
        %747 = vmatpush2.bf16.msra.mxu0 0
        %748 = vmatprep.subr.bf16.mxu0 0
        %749 = vmatpush2.bf16.msra.mxu0 0
        %750 = vmatprep.subr.bf16.mxu0 0
        %751 = vmatpush2.bf16.msra.mxu0 0
        %752 = vmatprep.subr.bf16.mxu0 0
        %753 = vmatpush2.bf16.msra.mxu0 0
        %754 = vmatprep.subr.bf16.mxu0 0
        %755 = vmatpush2.bf16.msra.mxu0 0
        %756 = vmatprep.subr.bf16.mxu0 0
        %757 = vmatpush2.bf16.msra.mxu0 0
        %758 = vmatprep.subr.bf16.mxu0 0
        %759 = vmatpush2.bf16.msra.mxu0 0
        %760 = vmatprep.mubr.bf16.mxu0 0
        %761 = vmatmul.mubr.bf16.gmra.mxu0 %v600
        %v762 = vpop.f32.mrf.mxu0
        %v763 = vadd.f32 %v714, %v762
        %v764 = vpop.f32.mrf.mxu0
        %v765 = vpop.f32.mrf.mxu0
        %v766 = vpop.f32.mrf.mxu0
        %767 = vdwg.mxu0
        %v768 = vpack.c.bf16 %v637, %v637
        %vm769 = vcmask 60416
        %770 = vst.msk [vmem:[#allocation2] sm:$0xf] %vm769, %v768
        %v771 = vpack.c.bf16 %v700, %v700
        %772 = vst.msk [vmem:[#allocation3] sm:$0xf] %vm769, %v771
        %v773 = vpack.c.bf16 %v763, %v763
        %774 = vst.msk [vmem:[#allocation4] sm:$0xf] %vm769, %v773
        %v776 = vunpack.c.l.b16 %v768
        %v777 = vpack.c.b16 %v776, %v776
        %778 = vrot.lane.b32.xlu0 %v777, 120
        %v779 = vpop.permute.xlu0 %778
        %s781 = scalar_lea.vmem [#allocation2], 4
        %782 = vst.msk [vmem:[%s781] sm:$0xf] %vm769, %v779
        %v784 = vunpack.c.l.b16 %v771
        %v785 = vpack.c.b16 %v784, %v784
        %786 = vrot.lane.b32.xlu0 %v785, 120
        %v787 = vpop.permute.xlu0 %786
        %s789 = scalar_lea.vmem [#allocation3], 4
        %790 = vst.msk [vmem:[%s789] sm:$0xf] %vm769, %v787
        %v792 = vunpack.c.l.b16 %v773
        %v793 = vpack.c.b16 %v792, %v792
        %794 = vrot.lane.b32.xlu0 %v793, 120
        %v795 = vpop.permute.xlu0 %794
        %s797 = scalar_lea.vmem [#allocation4], 4
        %798 = vst.msk [vmem:[%s797] sm:$0xf] %vm769, %v795
        %799 = vrot.lane.b32.xlu0 %v777, 112
        %v800 = vpop.permute.xlu0 %799
        %s802 = scalar_lea.vmem [#allocation2], 8
        %803 = vst.msk [vmem:[%s802] sm:$0xf] %vm769, %v800
        %804 = vrot.lane.b32.xlu0 %v785, 112
        %v805 = vpop.permute.xlu0 %804
        %s807 = scalar_lea.vmem [#allocation3], 8
        %808 = vst.msk [vmem:[%s807] sm:$0xf] %vm769, %v805
        %809 = vrot.lane.b32.xlu0 %v793, 112
        %v810 = vpop.permute.xlu0 %809
        %s812 = scalar_lea.vmem [#allocation4], 8
        %813 = vst.msk [vmem:[%s812] sm:$0xf] %vm769, %v810
        %814 = vrot.lane.b32.xlu0 %v777, 104
        %v815 = vpop.permute.xlu0 %814
        %s817 = scalar_lea.vmem [#allocation2], 12
        %818 = vst.msk [vmem:[%s817] sm:$0xf] %vm769, %v815
        %819 = vrot.lane.b32.xlu0 %v785, 104
        %v820 = vpop.permute.xlu0 %819
        %s822 = scalar_lea.vmem [#allocation3], 12
        %823 = vst.msk [vmem:[%s822] sm:$0xf] %vm769, %v820
        %824 = vrot.lane.b32.xlu0 %v793, 104
        %v825 = vpop.permute.xlu0 %824
        %s827 = scalar_lea.vmem [#allocation4], 12
        %828 = vst.msk [vmem:[%s827] sm:$0xf] %vm769, %v825
        %v829 = vld [vmem:[#allocation2] sm:$0xf]
        %v830 = vld [vmem:[#allocation2 + $0x4] sm:$0xf]
        %v831 = vld [vmem:[#allocation2 + $0x8] sm:$0xf]
        %v832 = vld [vmem:[#allocation2 + $0xc] sm:$0xf]
        %v833 = vld [vmem:[#allocation3] sm:$0xf]
        %v834 = vld [vmem:[#allocation3 + $0x4] sm:$0xf]
        %v835 = vld [vmem:[#allocation3 + $0x8] sm:$0xf]
        %v836 = vld [vmem:[#allocation3 + $0xc] sm:$0xf]
        %vm837 = vcmask 64512
        %v839 = vsel %vm837, %v829, 0
        %v842 = vsel %vm837, %v833, 0
        %844 = vmatprep.subr.bf16.mxu0 0
        %845 = vmatpush1.bf16.xpose.msra.mxu0 0
        %846 = vmatprep.subr.bf16.mxu0 0
        %847 = vmatpush1.bf16.xpose.msra.mxu0 0
        %848 = vmatprep.subr.bf16.mxu0 0
        %849 = vmatpush1.bf16.xpose.msra.mxu0 0
        %850 = vmatprep.subr.bf16.mxu0 0
        %851 = vmatpush1.bf16.xpose.msra.mxu0 0
        %852 = vmatprep.subr.bf16.mxu0 0
        %853 = vmatpush1.bf16.xpose.msra.mxu0 0
        %854 = vmatprep.subr.bf16.mxu0 0
        %855 = vmatpush1.bf16.xpose.msra.mxu0 0
        %856 = vmatprep.subr.bf16.mxu0 0
        %857 = vmatpush1.bf16.xpose.msra.mxu0 0
        %858 = vmatprep.subr.bf16.mxu0 0
        %859 = vmatpush1.bf16.xpose.msra.mxu0 %v842
        %860 = vmatprep.subr.bf16.mxu0 0
        %861 = vmatpush2.bf16.xpose.msra.mxu0 0
        %862 = vmatprep.subr.bf16.mxu0 0
        %863 = vmatpush2.bf16.xpose.msra.mxu0 0
        %864 = vmatprep.subr.bf16.mxu0 0
        %865 = vmatpush2.bf16.xpose.msra.mxu0 0
        %866 = vmatprep.subr.bf16.mxu0 0
        %867 = vmatpush2.bf16.xpose.msra.mxu0 0
        %868 = vmatprep.subr.bf16.mxu0 0
        %869 = vmatpush2.bf16.xpose.msra.mxu0 0
        %870 = vmatprep.subr.bf16.mxu0 0
        %871 = vmatpush2.bf16.xpose.msra.mxu0 0
        %872 = vmatprep.subr.bf16.mxu0 0
        %873 = vmatpush2.bf16.xpose.msra.mxu0 0
        %874 = vmatprep.subr.bf16.mxu0 0
        %875 = vmatpush2.bf16.xpose.msra.mxu0 0
        %876 = vmatprep.mubr.bf16.mxu0 0
        %877 = vmatmul.mubr.bf16.gmra.mxu0 %v839
        %v878 = vpop.f32.mrf.mxu0
        %v879 = vadd.f32 0.0, %v878
        %v880 = vpop.f32.mrf.mxu0
        %v881 = vpop.f32.mrf.mxu0
        %v882 = vpop.f32.mrf.mxu0
        %883 = vdwg.mxu0
        %v885 = vsel %vm837, %v830, 0
        %v888 = vsel %vm837, %v834, 0
        %890 = vmatprep.subr.bf16.mxu0 0
        %891 = vmatpush1.bf16.xpose.msra.mxu0 0
        %892 = vmatprep.subr.bf16.mxu0 0
        %893 = vmatpush1.bf16.xpose.msra.mxu0 0
        %894 = vmatprep.subr.bf16.mxu0 0
        %895 = vmatpush1.bf16.xpose.msra.mxu0 0
        %896 = vmatprep.subr.bf16.mxu0 0
        %897 = vmatpush1.bf16.xpose.msra.mxu0 0
        %898 = vmatprep.subr.bf16.mxu0 0
        %899 = vmatpush1.bf16.xpose.msra.mxu0 0
        %900 = vmatprep.subr.bf16.mxu0 0
        %901 = vmatpush1.bf16.xpose.msra.mxu0 0
        %902 = vmatprep.subr.bf16.mxu0 0
        %903 = vmatpush1.bf16.xpose.msra.mxu0 0
        %904 = vmatprep.subr.bf16.mxu0 0
        %905 = vmatpush1.bf16.xpose.msra.mxu0 %v888
        %906 = vmatprep.subr.bf16.mxu0 0
        %907 = vmatpush2.bf16.xpose.msra.mxu0 0
        %908 = vmatprep.subr.bf16.mxu0 0
        %909 = vmatpush2.bf16.xpose.msra.mxu0 0
        %910 = vmatprep.subr.bf16.mxu0 0
        %911 = vmatpush2.bf16.xpose.msra.mxu0 0
        %912 = vmatprep.subr.bf16.mxu0 0
        %913 = vmatpush2.bf16.xpose.msra.mxu0 0
        %914 = vmatprep.subr.bf16.mxu0 0
        %915 = vmatpush2.bf16.xpose.msra.mxu0 0
        %916 = vmatprep.subr.bf16.mxu0 0
        %917 = vmatpush2.bf16.xpose.msra.mxu0 0
        %918 = vmatprep.subr.bf16.mxu0 0
        %919 = vmatpush2.bf16.xpose.msra.mxu0 0
        %920 = vmatprep.subr.bf16.mxu0 0
        %921 = vmatpush2.bf16.xpose.msra.mxu0 0
        %922 = vmatprep.mubr.bf16.mxu0 0
        %923 = vmatmul.mubr.bf16.gmra.mxu0 %v885
        %v924 = vpop.f32.mrf.mxu0
        %v925 = vadd.f32 0.0, %v924
        %v926 = vpop.f32.mrf.mxu0
        %v927 = vpop.f32.mrf.mxu0
        %v928 = vpop.f32.mrf.mxu0
        %929 = vdwg.mxu0
        %v931 = vsel %vm837, %v831, 0
        %v934 = vsel %vm837, %v835, 0
        %936 = vmatprep.subr.bf16.mxu0 0
        %937 = vmatpush1.bf16.xpose.msra.mxu0 0
        %938 = vmatprep.subr.bf16.mxu0 0
        %939 = vmatpush1.bf16.xpose.msra.mxu0 0
        %940 = vmatprep.subr.bf16.mxu0 0
        %941 = vmatpush1.bf16.xpose.msra.mxu0 0
        %942 = vmatprep.subr.bf16.mxu0 0
        %943 = vmatpush1.bf16.xpose.msra.mxu0 0
        %944 = vmatprep.subr.bf16.mxu0 0
        %945 = vmatpush1.bf16.xpose.msra.mxu0 0
        %946 = vmatprep.subr.bf16.mxu0 0
        %947 = vmatpush1.bf16.xpose.msra.mxu0 0
        %948 = vmatprep.subr.bf16.mxu0 0
        %949 = vmatpush1.bf16.xpose.msra.mxu0 0
        %950 = vmatprep.subr.bf16.mxu0 0
        %951 = vmatpush1.bf16.xpose.msra.mxu0 %v934
        %952 = vmatprep.subr.bf16.mxu0 0
        %953 = vmatpush2.bf16.xpose.msra.mxu0 0
        %954 = vmatprep.subr.bf16.mxu0 0
        %955 = vmatpush2.bf16.xpose.msra.mxu0 0
        %956 = vmatprep.subr.bf16.mxu0 0
        %957 = vmatpush2.bf16.xpose.msra.mxu0 0
        %958 = vmatprep.subr.bf16.mxu0 0
        %959 = vmatpush2.bf16.xpose.msra.mxu0 0
        %960 = vmatprep.subr.bf16.mxu0 0
        %961 = vmatpush2.bf16.xpose.msra.mxu0 0
        %962 = vmatprep.subr.bf16.mxu0 0
        %963 = vmatpush2.bf16.xpose.msra.mxu0 0
        %964 = vmatprep.subr.bf16.mxu0 0
        %965 = vmatpush2.bf16.xpose.msra.mxu0 0
        %966 = vmatprep.subr.bf16.mxu0 0
        %967 = vmatpush2.bf16.xpose.msra.mxu0 0
        %968 = vmatprep.mubr.bf16.mxu0 0
        %969 = vmatmul.mubr.bf16.gmra.mxu0 %v931
        %v970 = vpop.f32.mrf.mxu0
        %v971 = vadd.f32 0.0, %v970
        %v972 = vpop.f32.mrf.mxu0
        %v973 = vpop.f32.mrf.mxu0
        %v974 = vpop.f32.mrf.mxu0
        %975 = vdwg.mxu0
        %v977 = vsel %vm837, %v832, 0
        %v980 = vsel %vm837, %v836, 0
        %982 = vmatprep.subr.bf16.mxu0 0
        %983 = vmatpush1.bf16.xpose.msra.mxu0 0
        %984 = vmatprep.subr.bf16.mxu0 0
        %985 = vmatpush1.bf16.xpose.msra.mxu0 0
        %986 = vmatprep.subr.bf16.mxu0 0
        %987 = vmatpush1.bf16.xpose.msra.mxu0 0
        %988 = vmatprep.subr.bf16.mxu0 0
        %989 = vmatpush1.bf16.xpose.msra.mxu0 0
        %990 = vmatprep.subr.bf16.mxu0 0
        %991 = vmatpush1.bf16.xpose.msra.mxu0 0
        %992 = vmatprep.subr.bf16.mxu0 0
        %993 = vmatpush1.bf16.xpose.msra.mxu0 0
        %994 = vmatprep.subr.bf16.mxu0 0
        %995 = vmatpush1.bf16.xpose.msra.mxu0 0
        %996 = vmatprep.subr.bf16.mxu0 0
        %997 = vmatpush1.bf16.xpose.msra.mxu0 %v980
        %998 = vmatprep.subr.bf16.mxu0 0
        %999 = vmatpush2.bf16.xpose.msra.mxu0 0
        %1000 = vmatprep.subr.bf16.mxu0 0
        %1001 = vmatpush2.bf16.xpose.msra.mxu0 0
        %1002 = vmatprep.subr.bf16.mxu0 0
        %1003 = vmatpush2.bf16.xpose.msra.mxu0 0
        %1004 = vmatprep.subr.bf16.mxu0 0
        %1005 = vmatpush2.bf16.xpose.msra.mxu0 0
        %1006 = vmatprep.subr.bf16.mxu0 0
        %1007 = vmatpush2.bf16.xpose.msra.mxu0 0
        %1008 = vmatprep.subr.bf16.mxu0 0
        %1009 = vmatpush2.bf16.xpose.msra.mxu0 0
        %1010 = vmatprep.subr.bf16.mxu0 0
        %1011 = vmatpush2.bf16.xpose.msra.mxu0 0
        %1012 = vmatprep.subr.bf16.mxu0 0
        %1013 = vmatpush2.bf16.xpose.msra.mxu0 0
        %1014 = vmatprep.mubr.bf16.mxu0 0
        %1015 = vmatmul.mubr.bf16.gmra.mxu0 %v977
        %v1016 = vpop.f32.mrf.mxu0
        %v1017 = vadd.f32 0.0, %v1016
        %v1018 = vpop.f32.mrf.mxu0
        %v1019 = vpop.f32.mrf.mxu0
        %v1020 = vpop.f32.mrf.mxu0
        %1021 = vdwg.mxu0
        %v1022 = vsel %vm837, %v879, -inf
        %1023 = vmax.xlane.f32.xlu0 %v1022
        %v1024 = vpop.xlane.xlu0 %1023
        %v1025 = vsel %vm837, %v925, -inf
        %1026 = vmax.xlane.f32.xlu0 %v1025
        %v1027 = vpop.xlane.xlu0 %1026
        %v1028 = vsel %vm837, %v971, -inf
        %1029 = vmax.xlane.f32.xlu0 %v1028
        %v1030 = vpop.xlane.xlu0 %1029
        %v1031 = vsel %vm837, %v1017, -inf
        %1032 = vmax.xlane.f32.xlu0 %v1031
        %v1033 = vpop.xlane.xlu0 %1032
        %v1034 = vsub.f32 %v879, %v1024
        %v1035 = vsub.f32 %v925, %v1027
        %v1036 = vsub.f32 %v971, %v1030
        %v1037 = vsub.f32 %v1017, %v1033
        %v1038 = vmul.f32 %v1034, 1.442695
        %v1039 = vpow.pop %v1038
        %v1040 = vmul.f32 %v1035, 1.442695
        %v1041 = vpow.pop %v1040
        %v1042 = vmul.f32 %v1036, 1.442695
        %v1043 = vpow.pop %v1042
        %v1044 = vmul.f32 %v1037, 1.442695
        %v1045 = vpow.pop %v1044
        %v1046 = vsel %vm837, %v1039, 0.0
        %1047 = vadd.xlane.f32.xlu0 %v1046
        %v1048 = vpop.xlane.xlu0 %1047
        %v1049 = vsel %vm837, %v1041, 0.0
        %1050 = vadd.xlane.f32.xlu0 %v1049
        %v1051 = vpop.xlane.xlu0 %1050
        %v1052 = vsel %vm837, %v1043, 0.0
        %1053 = vadd.xlane.f32.xlu0 %v1052
        %v1054 = vpop.xlane.xlu0 %1053
        %v1055 = vsel %vm837, %v1045, 0.0
        %1056 = vadd.xlane.f32.xlu0 %v1055
        %v1057 = vpop.xlane.xlu0 %1056
        %v1058 = vpack.c.bf16 %v1039, %v1039
        %v1059 = vpack.c.bf16 %v1041, %v1041
        %v1060 = vpack.c.bf16 %v1043, %v1043
        %v1061 = vpack.c.bf16 %v1045, %v1045
        %v1062 = vld [vmem:[#allocation4] sm:$0xf]
        %v1063 = vld [vmem:[#allocation4 + $0x4] sm:$0xf]
        %v1064 = vld [vmem:[#allocation4 + $0x8] sm:$0xf]
        %v1065 = vld [vmem:[#allocation4 + $0xc] sm:$0xf]
        %v1067 = vsel %vm837, %v1058, 0
        %vm1069 = vcmask 1043456
        %v1071 = vsel %vm1069, %v1062, 0
        %1073 = vmatprep.subr.bf16.mxu0 0
        %1074 = vmatpush1.bf16.msra.mxu0 0
        %1075 = vmatprep.subr.bf16.mxu0 0
        %1076 = vmatpush1.bf16.msra.mxu0 0
        %1077 = vmatprep.subr.bf16.mxu0 0
        %1078 = vmatpush1.bf16.msra.mxu0 0
        %1079 = vmatprep.subr.bf16.mxu0 0
        %1080 = vmatpush1.bf16.msra.mxu0 0
        %1081 = vmatprep.subr.bf16.mxu0 0
        %1082 = vmatpush1.bf16.msra.mxu0 0
        %1083 = vmatprep.subr.bf16.mxu0 0
        %1084 = vmatpush1.bf16.msra.mxu0 0
        %1085 = vmatprep.subr.bf16.mxu0 0
        %1086 = vmatpush1.bf16.msra.mxu0 0
        %1087 = vmatprep.subr.bf16.mxu0 0
        %1088 = vmatpush1.bf16.msra.mxu0 %v1071
        %1089 = vmatprep.subr.bf16.mxu0 0
        %1090 = vmatpush2.bf16.msra.mxu0 0
        %1091 = vmatprep.subr.bf16.mxu0 0
        %1092 = vmatpush2.bf16.msra.mxu0 0
        %1093 = vmatprep.subr.bf16.mxu0 0
        %1094 = vmatpush2.bf16.msra.mxu0 0
        %1095 = vmatprep.subr.bf16.mxu0 0
        %1096 = vmatpush2.bf16.msra.mxu0 0
        %1097 = vmatprep.subr.bf16.mxu0 0
        %1098 = vmatpush2.bf16.msra.mxu0 0
        %1099 = vmatprep.subr.bf16.mxu0 0
        %1100 = vmatpush2.bf16.msra.mxu0 0
        %1101 = vmatprep.subr.bf16.mxu0 0
        %1102 = vmatpush2.bf16.msra.mxu0 0
        %1103 = vmatprep.subr.bf16.mxu0 0
        %1104 = vmatpush2.bf16.msra.mxu0 0
        %1105 = vmatprep.mubr.bf16.mxu0 0
        %1106 = vmatmul.mubr.bf16.gmra.mxu0 %v1067
        %v1107 = vpop.f32.mrf.mxu0
        %v1108 = vadd.f32 0.0, %v1107
        %v1109 = vpop.f32.mrf.mxu0
        %v1110 = vpop.f32.mrf.mxu0
        %v1111 = vpop.f32.mrf.mxu0
        %1112 = vdwg.mxu0
        %v1114 = vsel %vm837, %v1059, 0
        %v1117 = vsel %vm1069, %v1063, 0
        %1119 = vmatprep.subr.bf16.mxu0 0
        %1120 = vmatpush1.bf16.msra.mxu0 0
        %1121 = vmatprep.subr.bf16.mxu0 0
        %1122 = vmatpush1.bf16.msra.mxu0 0
        %1123 = vmatprep.subr.bf16.mxu0 0
        %1124 = vmatpush1.bf16.msra.mxu0 0
        %1125 = vmatprep.subr.bf16.mxu0 0
        %1126 = vmatpush1.bf16.msra.mxu0 0
        %1127 = vmatprep.subr.bf16.mxu0 0
        %1128 = vmatpush1.bf16.msra.mxu0 0
        %1129 = vmatprep.subr.bf16.mxu0 0
        %1130 = vmatpush1.bf16.msra.mxu0 0
        %1131 = vmatprep.subr.bf16.mxu0 0
        %1132 = vmatpush1.bf16.msra.mxu0 0
        %1133 = vmatprep.subr.bf16.mxu0 0
        %1134 = vmatpush1.bf16.msra.mxu0 %v1117
        %1135 = vmatprep.subr.bf16.mxu0 0
        %1136 = vmatpush2.bf16.msra.mxu0 0
        %1137 = vmatprep.subr.bf16.mxu0 0
        %1138 = vmatpush2.bf16.msra.mxu0 0
        %1139 = vmatprep.subr.bf16.mxu0 0
        %1140 = vmatpush2.bf16.msra.mxu0 0
        %1141 = vmatprep.subr.bf16.mxu0 0
        %1142 = vmatpush2.bf16.msra.mxu0 0
        %1143 = vmatprep.subr.bf16.mxu0 0
        %1144 = vmatpush2.bf16.msra.mxu0 0
        %1145 = vmatprep.subr.bf16.mxu0 0
        %1146 = vmatpush2.bf16.msra.mxu0 0
        %1147 = vmatprep.subr.bf16.mxu0 0
        %1148 = vmatpush2.bf16.msra.mxu0 0
        %1149 = vmatprep.subr.bf16.mxu0 0
        %1150 = vmatpush2.bf16.msra.mxu0 0
        %1151 = vmatprep.mubr.bf16.mxu0 0
        %1152 = vmatmul.mubr.bf16.gmra.mxu0 %v1114
        %v1153 = vpop.f32.mrf.mxu0
        %v1154 = vadd.f32 0.0, %v1153
        %v1155 = vpop.f32.mrf.mxu0
        %v1156 = vpop.f32.mrf.mxu0
        %v1157 = vpop.f32.mrf.mxu0
        %1158 = vdwg.mxu0
        %v1160 = vsel %vm837, %v1060, 0
        %v1163 = vsel %vm1069, %v1064, 0
        %1165 = vmatprep.subr.bf16.mxu0 0
        %1166 = vmatpush1.bf16.msra.mxu0 0
        %1167 = vmatprep.subr.bf16.mxu0 0
        %1168 = vmatpush1.bf16.msra.mxu0 0
        %1169 = vmatprep.subr.bf16.mxu0 0
        %1170 = vmatpush1.bf16.msra.mxu0 0
        %1171 = vmatprep.subr.bf16.mxu0 0
        %1172 = vmatpush1.bf16.msra.mxu0 0
        %1173 = vmatprep.subr.bf16.mxu0 0
        %1174 = vmatpush1.bf16.msra.mxu0 0
        %1175 = vmatprep.subr.bf16.mxu0 0
        %1176 = vmatpush1.bf16.msra.mxu0 0
        %1177 = vmatprep.subr.bf16.mxu0 0
        %1178 = vmatpush1.bf16.msra.mxu0 0
        %1179 = vmatprep.subr.bf16.mxu0 0
        %1180 = vmatpush1.bf16.msra.mxu0 %v1163
        %1181 = vmatprep.subr.bf16.mxu0 0
        %1182 = vmatpush2.bf16.msra.mxu0 0
        %1183 = vmatprep.subr.bf16.mxu0 0
        %1184 = vmatpush2.bf16.msra.mxu0 0
        %1185 = vmatprep.subr.bf16.mxu0 0
        %1186 = vmatpush2.bf16.msra.mxu0 0
        %1187 = vmatprep.subr.bf16.mxu0 0
        %1188 = vmatpush2.bf16.msra.mxu0 0
        %1189 = vmatprep.subr.bf16.mxu0 0
        %1190 = vmatpush2.bf16.msra.mxu0 0
        %1191 = vmatprep.subr.bf16.mxu0 0
        %1192 = vmatpush2.bf16.msra.mxu0 0
        %1193 = vmatprep.subr.bf16.mxu0 0
        %1194 = vmatpush2.bf16.msra.mxu0 0
        %1195 = vmatprep.subr.bf16.mxu0 0
        %1196 = vmatpush2.bf16.msra.mxu0 0
        %1197 = vmatprep.mubr.bf16.mxu0 0
        %1198 = vmatmul.mubr.bf16.gmra.mxu0 %v1160
        %v1199 = vpop.f32.mrf.mxu0
        %v1200 = vadd.f32 0.0, %v1199
        %v1201 = vpop.f32.mrf.mxu0
        %v1202 = vpop.f32.mrf.mxu0
        %v1203 = vpop.f32.mrf.mxu0
        %1204 = vdwg.mxu0
        %v1206 = vsel %vm837, %v1061, 0
        %v1209 = vsel %vm1069, %v1065, 0
        %1211 = vmatprep.subr.bf16.mxu0 0
        %1212 = vmatpush1.bf16.msra.mxu0 0
        %1213 = vmatprep.subr.bf16.mxu0 0
        %1214 = vmatpush1.bf16.msra.mxu0 0
        %1215 = vmatprep.subr.bf16.mxu0 0
        %1216 = vmatpush1.bf16.msra.mxu0 0
        %1217 = vmatprep.subr.bf16.mxu0 0
        %1218 = vmatpush1.bf16.msra.mxu0 0
        %1219 = vmatprep.subr.bf16.mxu0 0
        %1220 = vmatpush1.bf16.msra.mxu0 0
        %1221 = vmatprep.subr.bf16.mxu0 0
        %1222 = vmatpush1.bf16.msra.mxu0 0
        %1223 = vmatprep.subr.bf16.mxu0 0
        %1224 = vmatpush1.bf16.msra.mxu0 0
        %1225 = vmatprep.subr.bf16.mxu0 0
        %1226 = vmatpush1.bf16.msra.mxu0 %v1209
        %1227 = vmatprep.subr.bf16.mxu0 0
        %1228 = vmatpush2.bf16.msra.mxu0 0
        %1229 = vmatprep.subr.bf16.mxu0 0
        %1230 = vmatpush2.bf16.msra.mxu0 0
        %1231 = vmatprep.subr.bf16.mxu0 0
        %1232 = vmatpush2.bf16.msra.mxu0 0
        %1233 = vmatprep.subr.bf16.mxu0 0
        %1234 = vmatpush2.bf16.msra.mxu0 0
        %1235 = vmatprep.subr.bf16.mxu0 0
        %1236 = vmatpush2.bf16.msra.mxu0 0
        %1237 = vmatprep.subr.bf16.mxu0 0
        %1238 = vmatpush2.bf16.msra.mxu0 0
        %1239 = vmatprep.subr.bf16.mxu0 0
        %1240 = vmatpush2.bf16.msra.mxu0 0
        %1241 = vmatprep.subr.bf16.mxu0 0
        %1242 = vmatpush2.bf16.msra.mxu0 0
        %1243 = vmatprep.mubr.bf16.mxu0 0
        %1244 = vmatmul.mubr.bf16.gmra.mxu0 %v1206
        %v1245 = vpop.f32.mrf.mxu0
        %v1246 = vadd.f32 0.0, %v1245
        %v1247 = vpop.f32.mrf.mxu0
        %v1248 = vpop.f32.mrf.mxu0
        %v1249 = vpop.f32.mrf.mxu0
        %1250 = vdwg.mxu0
        %v1251 = vrcp.pop %v1048
        %v1252 = vrcp.pop %v1051
        %v1253 = vrcp.pop %v1054
        %v1254 = vrcp.pop %v1057
        %v1255 = vmul.f32 %v1108, %v1251
        %v1256 = vmul.f32 %v1154, %v1252
        %v1257 = vmul.f32 %v1200, %v1253
        %v1258 = vmul.f32 %v1246, %v1254
        %v1259 = vpack.c.bf16 %v1255, %v1255
        %1260 = vst.msk [vmem:[#allocation5] sm:$0xf] %vm769, %v1259
        %v1261 = vpack.c.bf16 %v1256, %v1256
        %v1263 = vunpack.c.l.b16 %v1261
        %v1264 = vpack.c.b16 %v1263, %v1263
        %1265 = vrot.lane.b32.xlu0 %v1264, 8
        %v1266 = vpop.permute.xlu0 %1265
        %vm1268 = vcmask 126016
        %1269 = vst.msk [vmem:[#allocation5] sm:$0xf] %vm1268, %v1266
        %v1270 = vpack.c.bf16 %v1257, %v1257
        %v1272 = vunpack.c.l.b16 %v1270
        %v1273 = vpack.c.b16 %v1272, %v1272
        %1274 = vrot.lane.b32.xlu0 %v1273, 16
        %v1275 = vpop.permute.xlu0 %1274
        %vm1277 = vcmask 191616
        %1278 = vst.msk [vmem:[#allocation5] sm:$0xf] %vm1277, %v1275
        %v1279 = vpack.c.bf16 %v1258, %v1258
        %v1281 = vunpack.c.l.b16 %v1279
        %v1282 = vpack.c.b16 %v1281, %v1281
        %1283 = vrot.lane.b32.xlu0 %v1282, 24
        %v1284 = vpop.permute.xlu0 %1283
        %vm1286 = vcmask 257216
        %1287 = vst.msk [vmem:[#allocation5] sm:$0xf] %vm1286, %v1284
        %v1288 = vld [vmem:[#allocation5] sm:$0xf]
        %v1289 = vld [vmem:[%s7] sm:$0xf]
        %v1290 = vld [vmem:[%s7 + $0x4] sm:$0xf]
        %v1291 = vld [vmem:[%s7 + $0x8] sm:$0xf]
        %v1292 = vld [vmem:[%s7 + $0xc] sm:$0xf]
        %v1293 = vld [vmem:[%s8] sm:$0x1]
        %v1295 = vlaneseq
        %v1296 = vshrl.u32 %v1295, 7
        %v1297 = vsub.s32 0, %v1296
        %v1298 = vrot.slane %v1293, %v1297
        %v1304 = vunpack.c.l.b16 %v1289
        %v1305 = vunpack.c.l.b16 %v1290
        %v1306 = vunpack.c.l.b16 %v1291
        %v1307 = vunpack.c.l.b16 %v1292
        %v1308 = vpack.c.b16 %v1305, %v1304
        %v1309 = vpack.c.b16 %v1307, %v1306
        %v1313 = vsel %vm598, %v1288, 0
        %1315 = vmatprep.subr.bf16.mxu0 0
        %1316 = vmatpush1.bf16.msra.mxu0 0
        %1317 = vmatprep.subr.bf16.mxu0 0
        %1318 = vmatpush1.bf16.msra.mxu0 0
        %1319 = vmatprep.subr.bf16.mxu0 0
        %1320 = vmatpush1.bf16.msra.mxu0 0
        %1321 = vmatprep.subr.bf16.mxu0 0
        %1322 = vmatpush1.bf16.msra.mxu0 0
        %1323 = vmatprep.subr.bf16.mxu0 0
        %1324 = vmatpush1.bf16.msra.mxu0 0
        %1325 = vmatprep.subr.bf16.mxu0 0
        %1326 = vmatpush1.bf16.msra.mxu0 0
        %1327 = vmatprep.subr.bf16.mxu0 0
        %1328 = vmatpush1.bf16.msra.mxu0 %v1309
        %1329 = vmatprep.subr.bf16.mxu0 0
        %1330 = vmatpush1.bf16.msra.mxu0 %v1308
        %1331 = vmatprep.subr.bf16.mxu0 0
        %1332 = vmatpush2.bf16.msra.mxu0 0
        %1333 = vmatprep.subr.bf16.mxu0 0
        %1334 = vmatpush2.bf16.msra.mxu0 0
        %1335 = vmatprep.subr.bf16.mxu0 0
        %1336 = vmatpush2.bf16.msra.mxu0 0
        %1337 = vmatprep.subr.bf16.mxu0 0
        %1338 = vmatpush2.bf16.msra.mxu0 0
        %1339 = vmatprep.subr.bf16.mxu0 0
        %1340 = vmatpush2.bf16.msra.mxu0 0
        %1341 = vmatprep.subr.bf16.mxu0 0
        %1342 = vmatpush2.bf16.msra.mxu0 0
        %1343 = vmatprep.subr.bf16.mxu0 0
        %1344 = vmatpush2.bf16.msra.mxu0 0
        %1345 = vmatprep.subr.bf16.mxu0 0
        %1346 = vmatpush2.bf16.msra.mxu0 0
        %1347 = vmatprep.mubr.bf16.mxu0 0
        %1348 = vmatmul.mubr.bf16.gmra.mxu0 %v1313
        %v1349 = vpop.f32.mrf.mxu0
        %v1350 = vadd.f32 %v1298, %v1349
        %v1351 = vpop.f32.mrf.mxu0
        %v1352 = vpop.f32.mrf.mxu0
        %v1353 = vpop.f32.mrf.mxu0
        %1354 = vdwg.mxu0
        %v1355 = vadd.f32 %v573, %v1350
        %v1356 = vld [vmem:[%s13] sm:$0x1]
        %v1357 = vld [vmem:[%s14] sm:$0x1]
        %v1358 = vsel %vm598, %v1355, 0.0
        %1359 = vadd.xlane.f32.xlu0 %v1358
        %v1360 = vpop.xlane.xlu0 %1359
        %v1361 = vrcp.pop 32.0
        %v1362 = vmul.f32 %v1360, %v1361
        %v1363 = vsub.f32 %v1355, %v1362
        %v1364 = vmul.f32 %v1363, %v1363
        %v1365 = vsel %vm598, %v1364, 0.0
        %1366 = vadd.xlane.f32.xlu0 %v1365
        %v1367 = vpop.xlane.xlu0 %1366
        %v1368 = vmul.f32 %v1367, %v1361
        %v1369 = vadd.f32 %v1368, 1e-05
        %v1370 = vrsqrt.pop %v1369
        %v1371 = vmul.f32 %v1363, %v1370
        %v1373 = vlaneseq
        %v1374 = vshrl.u32 %v1373, 7
        %v1375 = vsub.s32 0, %v1374
        %v1376 = vrot.slane %v1356, %v1375
        %v1378 = vmul.f32 %v1371, %v1376
        %v1380 = vlaneseq
        %v1381 = vshrl.u32 %v1380, 7
        %v1382 = vsub.s32 0, %v1381
        %v1383 = vrot.slane %v1357, %v1382
        %v1385 = vadd.f32 %v1378, %v1383
        %v1386 = vpack.c.bf16 %v1385, %v1385
        %v1387 = vld [vmem:[#allocation6] sm:$0xf]
        %v1388 = vld [vmem:[#allocation6 + $0x4] sm:$0xf]
        %v1389 = vld [vmem:[#allocation6 + $0x8] sm:$0xf]
        %v1390 = vld [vmem:[#allocation6 + $0xc] sm:$0xf]
        %v1391 = vld [vmem:[#allocation9] sm:$0x1]
        %v1393 = vlaneseq
        %v1394 = vshrl.u32 %v1393, 7
        %v1395 = vsub.s32 0, %v1394
        %v1396 = vrot.slane %v1391, %v1395
        %v1402 = vunpack.c.l.b16 %v1387
        %v1403 = vunpack.c.l.b16 %v1388
        %v1404 = vunpack.c.l.b16 %v1389
        %v1405 = vunpack.c.l.b16 %v1390
        %v1406 = vpack.c.b16 %v1403, %v1402
        %v1407 = vpack.c.b16 %v1405, %v1404
        %v1411 = vsel %vm598, %v1386, 0
        %1413 = vmatprep.subr.bf16.mxu0 0
        %1414 = vmatpush1.bf16.msra.mxu0 0
        %1415 = vmatprep.subr.bf16.mxu0 0
        %1416 = vmatpush1.bf16.msra.mxu0 0
        %1417 = vmatprep.subr.bf16.mxu0 0
        %1418 = vmatpush1.bf16.msra.mxu0 0
        %1419 = vmatprep.subr.bf16.mxu0 0
        %1420 = vmatpush1.bf16.msra.mxu0 0
        %1421 = vmatprep.subr.bf16.mxu0 0
        %1422 = vmatpush1.bf16.msra.mxu0 0
        %1423 = vmatprep.subr.bf16.mxu0 0
        %1424 = vmatpush1.bf16.msra.mxu0 0
        %1425 = vmatprep.subr.bf16.mxu0 0
        %1426 = vmatpush1.bf16.msra.mxu0 %v1407
        %1427 = vmatprep.subr.bf16.mxu0 0
        %1428 = vmatpush1.bf16.msra.mxu0 %v1406
        %1429 = vmatprep.subr.bf16.mxu0 0
        %1430 = vmatpush2.bf16.msra.mxu0 0
        %1431 = vmatprep.subr.bf16.mxu0 0
        %1432 = vmatpush2.bf16.msra.mxu0 0
        %1433 = vmatprep.subr.bf16.mxu0 0
        %1434 = vmatpush2.bf16.msra.mxu0 0
        %1435 = vmatprep.subr.bf16.mxu0 0
        %1436 = vmatpush2.bf16.msra.mxu0 0
        %1437 = vmatprep.subr.bf16.mxu0 0
        %1438 = vmatpush2.bf16.msra.mxu0 0
        %1439 = vmatprep.subr.bf16.mxu0 0
        %1440 = vmatpush2.bf16.msra.mxu0 0
        %1441 = vmatprep.subr.bf16.mxu0 0
        %1442 = vmatpush2.bf16.msra.mxu0 0
        %1443 = vmatprep.subr.bf16.mxu0 0
        %1444 = vmatpush2.bf16.msra.mxu0 0
        %1445 = vmatprep.mubr.bf16.mxu0 0
        %1446 = vmatmul.mubr.bf16.gmra.mxu0 %v1411
        %v1447 = vpop.f32.mrf.mxu0
        %v1448 = vadd.f32 %v1396, %v1447
        %v1449 = vpop.f32.mrf.mxu0
        %v1450 = vpop.f32.mrf.mxu0
        %v1451 = vpop.f32.mrf.mxu0
        %1452 = vdwg.mxu0
        %v1453 = vmax.f32 %v1448, 0.0
        %v1454 = vpack.c.bf16 %v1453, %v1453
        %v1455 = vld [vmem:[%s11] sm:$0xf]
        %v1456 = vld [vmem:[%s11 + $0x4] sm:$0xf]
        %v1457 = vld [vmem:[%s11 + $0x8] sm:$0xf]
        %v1458 = vld [vmem:[%s11 + $0xc] sm:$0xf]
        %v1459 = vld [vmem:[%s11 + $0x10] sm:$0xf]
        %v1460 = vld [vmem:[%s11 + $0x14] sm:$0xf]
        %v1461 = vld [vmem:[%s11 + $0x18] sm:$0xf]
        %v1462 = vld [vmem:[%s11 + $0x1c] sm:$0xf]
        %v1463 = vld [vmem:[%s11 + $0x20] sm:$0xf]
        %v1464 = vld [vmem:[%s11 + $0x24] sm:$0xf]
        %v1465 = vld [vmem:[%s11 + $0x28] sm:$0xf]
        %v1466 = vld [vmem:[%s11 + $0x2c] sm:$0xf]
        %v1467 = vld [vmem:[%s11 + $0x30] sm:$0xf]
        %v1468 = vld [vmem:[%s11 + $0x34] sm:$0xf]
        %v1469 = vld [vmem:[%s11 + $0x38] sm:$0xf]
        %v1470 = vld [vmem:[%s11 + $0x3c] sm:$0xf]
        %v1471 = vld [vmem:[%s12] sm:$0x1]
        %v1473 = vlaneseq
        %v1474 = vshrl.u32 %v1473, 7
        %v1475 = vsub.s32 0, %v1474
        %v1476 = vrot.slane %v1471, %v1475
        %v1494 = vunpack.c.l.b16 %v1455
        %v1495 = vunpack.c.l.b16 %v1456
        %v1496 = vunpack.c.l.b16 %v1457
        %v1497 = vunpack.c.l.b16 %v1458
        %v1498 = vunpack.c.l.b16 %v1459
        %v1499 = vunpack.c.l.b16 %v1460
        %v1500 = vunpack.c.l.b16 %v1461
        %v1501 = vunpack.c.l.b16 %v1462
        %v1502 = vunpack.c.l.b16 %v1463
        %v1503 = vunpack.c.l.b16 %v1464
        %v1504 = vunpack.c.l.b16 %v1465
        %v1505 = vunpack.c.l.b16 %v1466
        %v1506 = vunpack.c.l.b16 %v1467
        %v1507 = vunpack.c.l.b16 %v1468
        %v1508 = vunpack.c.l.b16 %v1469
        %v1509 = vunpack.c.l.b16 %v1470
        %v1510 = vpack.c.b16 %v1495, %v1494
        %v1511 = vpack.c.b16 %v1497, %v1496
        %v1512 = vpack.c.b16 %v1499, %v1498
        %v1513 = vpack.c.b16 %v1501, %v1500
        %v1514 = vpack.c.b16 %v1503, %v1502
        %v1515 = vpack.c.b16 %v1505, %v1504
        %v1516 = vpack.c.b16 %v1507, %v1506
        %v1517 = vpack.c.b16 %v1509, %v1508
        %1526 = vmatprep.subr.bf16.mxu0 0
        %1527 = vmatpush1.bf16.msra.mxu0 %v1517
        %1528 = vmatprep.subr.bf16.mxu0 0
        %1529 = vmatpush1.bf16.msra.mxu0 %v1516
        %1530 = vmatprep.subr.bf16.mxu0 0
        %1531 = vmatpush1.bf16.msra.mxu0 %v1515
        %1532 = vmatprep.subr.bf16.mxu0 0
        %1533 = vmatpush1.bf16.msra.mxu0 %v1514
        %1534 = vmatprep.subr.bf16.mxu0 0
        %1535 = vmatpush1.bf16.msra.mxu0 %v1513
        %1536 = vmatprep.subr.bf16.mxu0 0
        %1537 = vmatpush1.bf16.msra.mxu0 %v1512
        %1538 = vmatprep.subr.bf16.mxu0 0
        %1539 = vmatpush1.bf16.msra.mxu0 %v1511
        %1540 = vmatprep.subr.bf16.mxu0 0
        %1541 = vmatpush1.bf16.msra.mxu0 %v1510
        %1542 = vmatprep.subr.bf16.mxu0 0
        %1543 = vmatpush2.bf16.msra.mxu0 0
        %1544 = vmatprep.subr.bf16.mxu0 0
        %1545 = vmatpush2.bf16.msra.mxu0 0
        %1546 = vmatprep.subr.bf16.mxu0 0
        %1547 = vmatpush2.bf16.msra.mxu0 0
        %1548 = vmatprep.subr.bf16.mxu0 0
        %1549 = vmatpush2.bf16.msra.mxu0 0
        %1550 = vmatprep.subr.bf16.mxu0 0
        %1551 = vmatpush2.bf16.msra.mxu0 0
        %1552 = vmatprep.subr.bf16.mxu0 0
        %1553 = vmatpush2.bf16.msra.mxu0 0
        %1554 = vmatprep.subr.bf16.mxu0 0
        %1555 = vmatpush2.bf16.msra.mxu0 0
        %1556 = vmatprep.subr.bf16.mxu0 0
        %1557 = vmatpush2.bf16.msra.mxu0 0
        %1558 = vmatprep.mubr.bf16.mxu0 0
        %1559 = vmatmul.mubr.bf16.gmra.mxu0 %v1454
        %v1560 = vpop.f32.mrf.mxu0
        %v1561 = vadd.f32 %v1476, %v1560
        %v1562 = vpop.f32.mrf.mxu0
        %v1563 = vpop.f32.mrf.mxu0
        %v1564 = vpop.f32.mrf.mxu0
        %1565 = vdwg.mxu0
        %v1566 = vadd.f32 %v1385, %v1561
        %v1567 = vld [vmem:[%s15] sm:$0x1]
        %v1568 = vld [vmem:[%s16] sm:$0x1]
        %v1569 = vsel %vm598, %v1566, 0.0
        %1570 = vadd.xlane.f32.xlu0 %v1569
        %v1571 = vpop.xlane.xlu0 %1570
        %v1572 = vmul.f32 %v1571, %v1361
        %v1573 = vsub.f32 %v1566, %v1572
        %v1574 = vmul.f32 %v1573, %v1573
        %v1575 = vsel %vm598, %v1574, 0.0
        %1576 = vadd.xlane.f32.xlu0 %v1575
        %v1577 = vpop.xlane.xlu0 %1576
        %v1578 = vmul.f32 %v1577, %v1361
        %v1579 = vadd.f32 %v1578, 1e-05
        %v1580 = vrsqrt.pop %v1579
        %v1581 = vmul.f32 %v1573, %v1580
        %v1583 = vlaneseq
        %v1584 = vshrl.u32 %v1583, 7
        %v1585 = vsub.s32 0, %v1584
        %v1586 = vrot.slane %v1567, %v1585
        %v1588 = vmul.f32 %v1581, %v1586
        %v1590 = vlaneseq
        %v1591 = vshrl.u32 %v1590, 7
        %v1592 = vsub.s32 0, %v1591
        %v1593 = vrot.slane %v1568, %v1592
        %v1595 = vadd.f32 %v1588, %v1593
        %1596 = vst.msk [vmem:[%s567] sm:$0xff] %vm598, %v1595
        %s1597 = sand.u32 %s403, 1
        %s1598 = scalar_lea.sflag [#allocation8], %s1597
        %s1599 = sand.u32 %s403, 1
        %s1600 = smul.addr %s1599, 8
        %s1601 = scalar_lea.vmem [#allocation11], %s1600
        // Predicated region
        $region97: #{tpu_custom_call.1} parent=87 // pred_check
          %p1602 = pneg %p413
        $region98: #{tpu_custom_call.1} parent=87 // pred_check_branch
          %1604 = sbr.rel (%p1602) target = $region100
        $region99: #{tpu_custom_call.1} parent=87 // pred_region
          %s1606 = ssub.s32 128, 128
          %1607 = vsyncadd %s1598, %s1606
          %s1608 = smul.addr %s33, 128
          %s1609 = scalar_lea.hbm %s17, %s1608
          %s1611 = sshll.u32 %s1601, 4
          %s1612 = int_to_ptr.vmem [resolvable:$true] %s1611
          %1614 = dma.vmem_to_hbm [thread:$0]  %s1612, 128, %s1609, %s1598
        $region100: #{tpu_custom_call.1} parent=87 // pred_fallthru
          _
      $region88: #{tpu_custom_call.1} parent=5 // pred_fallthru
        _
      %p1615 = scmp.le.s32.totalorder 2, %s28
      // Predicated region
      $region101: #{tpu_custom_call.1} parent=5 // pred_check
        %p1616 = pneg %p1615
      $region102: #{tpu_custom_call.1} parent=5 // pred_check_branch
        %1618 = sbr.rel (%p1616) target = $region104
      $region103: #{tpu_custom_call.1} parent=5 // pred_region
        %s1619 = ssub.s32 %s28, 2
        // Predicated region
        $region105: #{tpu_custom_call.1} parent=103 // pred_check
          %p1620 = pneg %p419
        $region106: #{tpu_custom_call.1} parent=103 // pred_check_branch
          %1622 = sbr.rel (%p1620) target = $region108
        $region107: #{tpu_custom_call.1} parent=103 // pred_region
          %s1623 = sand.u32 %s404, 1
          %s1624 = scalar_lea.sflag [#allocation8], %s1623
          %s1625 = sand.u32 %s404, 1
          %s1626 = smul.addr %s1625, 8
          %s1627 = scalar_lea.vmem [#allocation11], %s1626
          %1628 = dma.done %s1624, 128
        $region108: #{tpu_custom_call.1} parent=103 // pred_fallthru
          _
      $region104: #{tpu_custom_call.1} parent=5 // pred_fallthru
        _
    $region6: #{tpu_custom_call.1} parent=1 // loop_footer
      %s32 = sadd.s32 1, %s28
    $region7: #{tpu_custom_call.1} parent=1 // loop_footer_branch
      %27 = sbr.rel target = $region3
    $region8: #{tpu_custom_call.1} parent=1 // loop_exit
      _
    %1629 = vsyncpa [#allocation7], 1
    %s1630 = scalar_lea.sflag [#allocation7], 1
    %1631 = vsyncpa %s1630, 1
    %1632 = vsyncpa [#allocation10], 1
    %1633 = vsyncpa [#allocation8], 1
    %s1634 = scalar_lea.sflag [#allocation8], 1
    %1635 = vsyncpa %s1634, 1

</llo_original>
